<compile_context>
chip_gen: v6e
topology: v6e:2x2x1
jax: 0.10.0
libtpu: 0.0.40
codegen_flags: <defaults>
</compile_context>

<pallas_src>
import functools
import math

import jax
import jax.numpy as jnp
from jax.experimental import pallas as pl
from jax.experimental.pallas import tpu as pltpu


def _aligned_loss_kernel(qlo_ref, qhi_ref,                       # scalar prefetch (SMEM)
                         samp_ref, src_ref, img_ref, tgt_ref, msk_ref,   # inputs
                         out_ref,                                 # output
                         acc_ref,                                 # scratch
                         *, H, W, tent_dtype):
    """Per (batch, dst-tile): accumulate the bilinear backwarp over the band of
    contributing source tiles, then flow-mask + user-mask + per-pixel L1."""
    b = pl.program_id(0)
    i = pl.program_id(1)
    q = pl.program_id(2)

    @pl.when(q == 0)
    def _init():
        acc_ref[...] = jnp.zeros_like(acc_ref)

    # band step q maps to source tile qlo[b,i] + q; skip if past the band end
    in_band = (qlo_ref[b, i] + q) <= qhi_ref[b, i]

    @pl.when(in_band)
    def _accumulate():
        samp = samp_ref[...]                     # (1, 2, TP) f32 sample coords
        sx = samp[0, 0:1, :]                     # (1, TP)
        sy = samp[0, 1:2, :]                     # (1, TP)
        src = src_ref[...]                       # (TQ, 2) f32 source grid coords
        xq = src[:, 0:1]                         # (TQ, 1)
        yq = src[:, 1:2]                         # (TQ, 1)

        # Differences in f32 (bf16 would lose whole pixels at large coords),
        # tent weights in tent_dtype (bf16 on bf16-VALU parts).
        dy = (sy - yq).astype(tent_dtype)        # (TQ, TP)
        dx = (sx - xq).astype(tent_dtype)        # (TQ, TP)
        wsamp = (jnp.maximum(0.0, 1.0 - jnp.abs(dy)) *
                 jnp.maximum(0.0, 1.0 - jnp.abs(dx)))    # (TQ, TP)

        img = img_ref[...][0].astype(tent_dtype)         # (C, TQ)
        # warp: (C, TQ) @ (TQ, TP) -> (C, TP), f32 accumulation
        acc_ref[...] += jnp.dot(img, wsamp, preferred_element_type=jnp.float32)

    @pl.when(q == pl.num_programs(2) - 1)
    def _finalize():
        samp = samp_ref[...]
        sx = samp[0, 0:1, :]
        sy = samp[0, 1:2, :]
        # Closed-form warped-ones (== total tent weight inside the image) ->
        # grid_sample(padding_mode='zeros') validity mask.
        wones = (jnp.clip(sx + 1.0, 0.0, 1.0) * jnp.clip(W - sx, 0.0, 1.0) *
                 jnp.clip(sy + 1.0, 0.0, 1.0) * jnp.clip(H - sy, 0.0, 1.0))
        flow_mask = jnp.where(wones > 0.999, 1.0, 0.0)            # (1, TP)
        m = flow_mask * msk_ref[...][0]                           # (1, TP)
        diff = m * jnp.abs(acc_ref[...] - tgt_ref[...][0])        # (C, TP)
        out_ref[...] = jnp.sum(diff, axis=0, keepdims=True).reshape(out_ref.shape)


def _round_up(x, m):
    return ((x + m - 1) // m) * m


def _pick_div_tile(total, pref):
    """Largest multiple of 128 <= pref dividing `total` (total is a 128-multiple)."""
    t = max(128, (min(pref, total) // 128) * 128)
    while t > 128 and total % t != 0:
        t -= 128
    return t


def _default_tent_dtype():
    try:
        kind = jax.devices()[0].device_kind.lower()
    except Exception:
        return jnp.float32
    for tag in ("v2", "v3", "v4", "v5"):       # no bf16 VALU on these parts
        if tag in kind:
            return jnp.float32
    return jnp.bfloat16                        # v6e / v7x


def aligned_loss(pred, target, flow, mask=None, loss_weight=1.0,
                 max_flow=16.0, tent_dtype=None, tp_pref=512, tq_pref=256):
    """JAX/Pallas equivalent of AlignedLoss.forward given the flow `offset[-1]`.

    pred, target : (N, C, H, W) float
    flow         : (N, 2, H, W) float, pixel displacements (dx, dy)
    mask         : optional (N, 1, H, W) float
    max_flow     : static clamp on |flow|, used both for sampling and for the
                   static source-tile band bound (band compaction).
    """
    if pred.ndim == 3:
        pred = pred[None]
    if target.ndim == 3:
        target = target[None]
    if tent_dtype is None:
        tent_dtype = _default_tent_dtype()

    N, C, H, W = pred.shape
    P = H * W
    f32 = jnp.float32
    if mask is None:
        mask = jnp.ones((N, 1, H, W), f32)

    # ---- tiling: lane-dense pixel axis, zero-padded to a multiple of TP ----
    TP = min(tp_pref, _round_up(P, 128))          # dst-pixel tile (lanes)
    P_pad = _round_up(P, TP)
    TQ = _pick_div_tile(P_pad, tq_pref)           # src-pixel tile (reduction)
    NI = P_pad // TP
    NQ = P_pad // TQ
    pad = P_pad - P

    img_p = jnp.pad(pred.astype(f32).reshape(N, C, P), ((0, 0), (0, 0), (0, pad)))
    tgt_p = jnp.pad(target.astype(f32).reshape(N, C, P), ((0, 0), (0, 0), (0, pad)))
    msk_p = jnp.pad(mask.astype(f32).reshape(N, 1, P), ((0, 0), (0, 0), (0, pad)))

    # ---- precomputed coordinates (kernel never does %W / //W) ----
    idx = jnp.arange(P_pad, dtype=jnp.int32)
    gx = (idx % W).astype(f32)
    gy = (idx // W).astype(f32)
    src_xy = jnp.stack([gx, gy], axis=-1)                         # (P_pad, 2)

    flow_c = jnp.clip(jnp.nan_to_num(flow.astype(f32).reshape(N, 2, P)),
                      -max_flow, max_flow)
    flow_c = jnp.pad(flow_c, ((0, 0), (0, 0), (0, pad)))          # 0 flow in pad
    samp = jnp.stack([gx, gy], axis=0)[None] + flow_c             # (N, 2, P_pad)

    # ---- per-(batch, dst-tile) band of contributing source tiles ----
    sy_t = samp[:, 1, :].reshape(N, NI, TP)
    row_lo = jnp.clip(jnp.floor(jnp.min(sy_t, axis=-1)) - 1.0, 0.0, H - 1.0)
    row_hi = jnp.clip(jnp.ceil(jnp.max(sy_t, axis=-1)) + 1.0, 0.0, H - 1.0)
    q_lo = (row_lo.astype(jnp.int32) * W) // TQ                   # (N, NI)
    q_hi = (row_hi.astype(jnp.int32) * W + (W - 1)) // TQ         # (N, NI)

    # static bound on the band width (tent support +-1 around dst + clamped flow)
    dst_rows = (TP - 1) // W + 2
    src_rows = dst_rows + 2 * int(math.ceil(max_flow)) + 8
    NBAND = max(1, min(NQ, -(-(src_rows * W) // TQ) + 2))

    kernel = functools.partial(_aligned_loss_kernel, H=H, W=W,
                               tent_dtype=tent_dtype)

    def _src_map(b, i, q, lo, hi):
        return (jnp.minimum(lo[b, i] + q, NQ - 1), 0)

    def _img_map(b, i, q, lo, hi):
        return (b, 0, jnp.minimum(lo[b, i] + q, NQ - 1))

    partials = pl.pallas_call(
        kernel,
        out_shape=jax.ShapeDtypeStruct((N, NI, 1, TP), jnp.float32),
        grid_spec=pltpu.PrefetchScalarGridSpec(
            num_scalar_prefetch=2,
            grid=(N, NI, NBAND),
            in_specs=[
                pl.BlockSpec((1, 2, TP), lambda b, i, q, lo, hi: (b, 0, i)),
                pl.BlockSpec((TQ, 2), _src_map),
                pl.BlockSpec((1, C, TQ), _img_map),
                pl.BlockSpec((1, C, TP), lambda b, i, q, lo, hi: (b, 0, i)),
                pl.BlockSpec((1, 1, TP), lambda b, i, q, lo, hi: (b, 0, i)),
            ],
            out_specs=pl.BlockSpec((1, 1, 1, TP),
                                   lambda b, i, q, lo, hi: (b, i, 0, 0)),
            scratch_shapes=[pltpu.VMEM((C, TP), jnp.float32)],   # warp accumulator
        ),
        compiler_params=pltpu.CompilerParams(
            dimension_semantics=("parallel", "parallel", "arbitrary"),
            vmem_limit_bytes=32 * 1024 * 1024,
        ),
    )(q_lo, q_hi, samp, src_xy, img_p, tgt_p, msk_p)

    # torch.nn.L1Loss default reduction='mean' over all (N, C, H, W) elements
    l_rec = jnp.sum(partials) / (N * C * H * W)
    return loss_weight * l_rec


def _reference_aligned_loss(pred, target, flow, mask=None, loss_weight=1.0):
    """Pure-JAX bilinear backwarp (zero padding) + warped-ones mask + L1 mean."""
    N, C, H, W = pred.shape
    gy, gx = jnp.meshgrid(jnp.arange(H, dtype=jnp.float32),
                          jnp.arange(W, dtype=jnp.float32), indexing="ij")
    sx = gx[None] + flow[:, 0]
    sy = gy[None] + flow[:, 1]
    x0 = jnp.floor(sx)
    y0 = jnp.floor(sy)
    wx1 = sx - x0
    wx0 = 1.0 - wx1
    wy1 = sy - y0
    wy0 = 1.0 - wy1
    x0i = x0.astype(jnp.int32)
    y0i = y0.astype(jnp.int32)

    def gather(img, xi, yi):
        Ci = img.shape[1]
        valid = ((xi >= 0) & (xi < W) & (yi >= 0) & (yi < H)).astype(img.dtype)
        xc = jnp.clip(xi, 0, W - 1)
        yc = jnp.clip(yi, 0, H - 1)
        flat = (yc * W + xc).reshape(N, 1, H * W)
        out = jnp.take_along_axis(img.reshape(N, Ci, H * W),
                                  jnp.broadcast_to(flat, (N, Ci, H * W)), axis=2)
        return out.reshape(N, Ci, H, W) * valid[:, None]

    def warp(img):
        return (gather(img, x0i, y0i) * (wx0 * wy0)[:, None]
                + gather(img, x0i + 1, y0i) * (wx1 * wy0)[:, None]
                + gather(img, x0i, y0i + 1) * (wx0 * wy1)[:, None]
                + gather(img, x0i + 1, y0i + 1) * (wx1 * wy1)[:, None])

    warped = warp(pred)
    wones = warp(jnp.ones((N, 1, H, W), jnp.float32))
    fm = (wones > 0.999).astype(jnp.float32)
    m = fm if mask is None else fm * mask
    return loss_weight * jnp.mean(jnp.abs(warped * m - target * m))


if __name__ == "__main__":
    key = jax.random.PRNGKey(0)
    k1, k2, k3 = jax.random.split(key, 3)
    N, C, H, W = 2, 4, 16, 16
    pred = jax.random.uniform(k1, (N, C, H, W), jnp.float32)
    target = jax.random.uniform(k2, (N, C, H, W), jnp.float32)
    # TODO(synk): deterministic synthetic flow stands in for RAFT's offset[-1].
    flow = jax.random.uniform(k3, (N, 2, H, W), jnp.float32, minval=-2.0, maxval=2.0)

    loss = aligned_loss(pred, target, flow)
    jax.block_until_ready(loss)

    ref = _reference_aligned_loss(pred, target, flow)
    jax.block_until_ready(ref)

    assert bool(jnp.isfinite(loss)), "non-finite loss"
    tol = 3e-2 * max(1e-3, abs(float(ref)))   # loose enough for bf16 tent path
    assert abs(float(loss) - float(ref)) <= tol, (float(loss), float(ref))
    print("KERNEL_OK")
</pallas_src>

<mosaic_0001>
module attributes {stable_mosaic.version = 11 : i64} {
  func.func @_aligned_loss_kernel(%arg0: i32, %arg1: i32, %arg2: i32, %arg3: memref<2x1xi32, #tpu.memory_space<smem>>, %arg4: memref<2x1xi32, #tpu.memory_space<smem>>, %arg5: memref<1x2x256xf32, #tpu.memory_space<vmem>>, %arg6: memref<256x2xf32, #tpu.memory_space<vmem>>, %arg7: memref<1x4x256xf32, #tpu.memory_space<vmem>>, %arg8: memref<1x4x256xf32, #tpu.memory_space<vmem>>, %arg9: memref<1x1x256xf32, #tpu.memory_space<vmem>>, %arg10: memref<1x1x1x256xf32, #tpu.memory_space<vmem>>, %arg11: memref<4x256xf32, #tpu.memory_space<vmem>>) attributes {dimension_semantics = [#tpu.dimension_semantics<parallel>, #tpu.dimension_semantics<parallel>, #tpu.dimension_semantics<arbitrary>], iteration_bounds = array<i64: 2, 1, 1>, scalar_prefetch = 2 : i64, scratch_operands = 1 : i64, tpu.core_type = #tpu.core_type<tc>, window_params = [{transform_indices = @transform_0, window_bounds = array<i64: 1, 2, 256>}, {transform_indices = @transform_1, window_bounds = array<i64: 256, 2>}, {transform_indices = @transform_2, window_bounds = array<i64: 1, 4, 256>}, {transform_indices = @transform_3, window_bounds = array<i64: 1, 4, 256>}, {transform_indices = @transform_4, window_bounds = array<i64: 1, 1, 256>}, {transform_indices = @transform_5, window_bounds = array<i64: 1, 1, 1, 256>}]} {
    %c0_i32 = arith.constant 0 : i32
    %0 = arith.cmpi eq, %arg2, %c0_i32 : i32
    %1 = arith.extui %0 : i1 to i32
    %c0_i32_0 = arith.constant 0 : i32
    %2 = arith.cmpi ne, %1, %c0_i32_0 : i32
    scf.if %2 {
      %cst = arith.constant 0.000000e+00 : f32
      %16 = vector.broadcast %cst : f32 to vector<4x256xf32>
      %c0 = arith.constant 0 : index
      %c0_4 = arith.constant 0 : index
      %17 = vector.load %arg11[%c0, %c0_4] : memref<4x256xf32, #tpu.memory_space<vmem>>, vector<4x256xf32>
      tpu.vector_store %arg11[%c0, %c0_4], %16 {strides = array<i32>} : memref<4x256xf32, #tpu.memory_space<vmem>>, vector<4x256xf32>,
    } else {
    }
    %3 = arith.index_cast %arg0 : i32 to index
    %4 = arith.index_cast %arg1 : i32 to index
    %5 = memref.load %arg3[%3, %4] : memref<2x1xi32, #tpu.memory_space<smem>>
    %6 = arith.addi %5, %arg2 : i32
    %7 = arith.index_cast %arg0 : i32 to index
    %8 = arith.index_cast %arg1 : i32 to index
    %9 = memref.load %arg4[%7, %8] : memref<2x1xi32, #tpu.memory_space<smem>>
    %10 = arith.cmpi sle, %6, %9 : i32
    %11 = arith.extui %10 : i1 to i32
    %c0_i32_1 = arith.constant 0 : i32
    %12 = arith.cmpi ne, %11, %c0_i32_1 : i32
    scf.if %12 {
      %c0 = arith.constant 0 : index
      %c0_4 = arith.constant 0 : index
      %c0_5 = arith.constant 0 : index
      %16 = vector.load %arg5[%c0, %c0_4, %c0_5] : memref<1x2x256xf32, #tpu.memory_space<vmem>>, vector<1x2x256xf32>
      %17 = vector.extract_strided_slice %16 {offsets = [0, 0, 0], sizes = [1, 1, 256], strides = [1, 1, 1]} : vector<1x2x256xf32> to vector<1x1x256xf32>
      %18 = vector.shape_cast %17 : vector<1x1x256xf32> to vector<1x256xf32>
      %19 = vector.extract_strided_slice %16 {offsets = [0, 1, 0], sizes = [1, 1, 256], strides = [1, 1, 1]} : vector<1x2x256xf32> to vector<1x1x256xf32>
      %20 = vector.shape_cast %19 : vector<1x1x256xf32> to vector<1x256xf32>
      %c0_6 = arith.constant 0 : index
      %c0_7 = arith.constant 0 : index
      %21 = vector.load %arg6[%c0_6, %c0_7] : memref<256x2xf32, #tpu.memory_space<vmem>>, vector<256x2xf32>
      %22 = vector.extract_strided_slice %21 {offsets = [0, 0], sizes = [256, 1], strides = [1, 1]} : vector<256x2xf32> to vector<256x1xf32>
      %23 = vector.extract_strided_slice %21 {offsets = [0, 1], sizes = [256, 1], strides = [1, 1]} : vector<256x2xf32> to vector<256x1xf32>
      %24 = vector.broadcast %20 : vector<1x256xf32> to vector<256x256xf32>
      %25 = vector.broadcast %23 : vector<256x1xf32> to vector<256x256xf32>
      %26 = arith.subf %24, %25 : vector<256x256xf32>
      %27 = arith.truncf %26 : vector<256x256xf32> to vector<256x256xbf16>
      %28 = vector.broadcast %18 : vector<1x256xf32> to vector<256x256xf32>
      %29 = vector.broadcast %22 : vector<256x1xf32> to vector<256x256xf32>
      %30 = arith.subf %28, %29 : vector<256x256xf32>
      %31 = arith.truncf %30 : vector<256x256xf32> to vector<256x256xbf16>
      %32 = math.absf %27 : vector<256x256xbf16>
      %cst = arith.constant 1.000000e+00 : bf16
      %33 = vector.broadcast %cst : bf16 to vector<256x256xbf16>
      %34 = arith.subf %33, %32 : vector<256x256xbf16>
      %cst_8 = arith.constant 0.000000e+00 : bf16
      %35 = vector.broadcast %cst_8 : bf16 to vector<256x256xbf16>
      %36 = arith.maximumf %35, %34 : vector<256x256xbf16>
      %37 = math.absf %31 : vector<256x256xbf16>
      %cst_9 = arith.constant 1.000000e+00 : bf16
      %38 = vector.broadcast %cst_9 : bf16 to vector<256x256xbf16>
      %39 = arith.subf %38, %37 : vector<256x256xbf16>
      %cst_10 = arith.constant 0.000000e+00 : bf16
      %40 = vector.broadcast %cst_10 : bf16 to vector<256x256xbf16>
      %41 = arith.maximumf %40, %39 : vector<256x256xbf16>
      %42 = arith.mulf %36, %41 : vector<256x256xbf16>
      %c0_11 = arith.constant 0 : index
      %c0_12 = arith.constant 0 : index
      %c0_13 = arith.constant 0 : index
      %43 = vector.load %arg7[%c0_11, %c0_12, %c0_13] : memref<1x4x256xf32, #tpu.memory_space<vmem>>, vector<1x4x256xf32>
      %44 = vector.shape_cast %43 : vector<1x4x256xf32> to vector<4x256xf32>
      %45 = arith.truncf %44 : vector<4x256xf32> to vector<4x256xbf16>
      %c0_14 = arith.constant 0 : index
      %c0_15 = arith.constant 0 : index
      %46 = vector.load %arg11[%c0_14, %c0_15] : memref<4x256xf32, #tpu.memory_space<vmem>>, vector<4x256xf32>
      %cst_16 = arith.constant dense<0.000000e+00> : vector<4x256xf32>
      %47 = tpu.matmul %45, %42, %cst_16 {dimension_numbers = #tpu.dot_dimension_numbers<[1], [0], [0], [1], [0, 0, 1, 1], [], []>} : vector<4x256xbf16>, vector<256x256xbf16>, vector<4x256xf32> -> vector<4x256xf32>
      %48 = arith.addf %46, %47 : vector<4x256xf32>
      %c0_17 = arith.constant 0 : index
      %c0_18 = arith.constant 0 : index
      %49 = vector.load %arg11[%c0_17, %c0_18] : memref<4x256xf32, #tpu.memory_space<vmem>>, vector<4x256xf32>
      tpu.vector_store %arg11[%c0_17, %c0_18], %48 {strides = array<i32>} : memref<4x256xf32, #tpu.memory_space<vmem>>, vector<4x256xf32>,
    } else {
    }
    %c0_i32_2 = arith.constant 0 : i32
    %13 = arith.cmpi eq, %arg2, %c0_i32_2 : i32
    %14 = arith.extui %13 : i1 to i32
    %c0_i32_3 = arith.constant 0 : i32
    %15 = arith.cmpi ne, %14, %c0_i32_3 : i32
    scf.if %15 {
      %c0 = arith.constant 0 : index
      %c0_4 = arith.constant 0 : index
      %c0_5 = arith.constant 0 : index
      %16 = vector.load %arg5[%c0, %c0_4, %c0_5] : memref<1x2x256xf32, #tpu.memory_space<vmem>>, vector<1x2x256xf32>
      %17 = vector.extract_strided_slice %16 {offsets = [0, 0, 0], sizes = [1, 1, 256], strides = [1, 1, 1]} : vector<1x2x256xf32> to vector<1x1x256xf32>
      %18 = vector.shape_cast %17 : vector<1x1x256xf32> to vector<1x256xf32>
      %19 = vector.extract_strided_slice %16 {offsets = [0, 1, 0], sizes = [1, 1, 256], strides = [1, 1, 1]} : vector<1x2x256xf32> to vector<1x1x256xf32>
      %20 = vector.shape_cast %19 : vector<1x1x256xf32> to vector<1x256xf32>
      %cst = arith.constant 1.000000e+00 : f32
      %21 = vector.broadcast %cst : f32 to vector<1x256xf32>
      %22 = arith.addf %18, %21 : vector<1x256xf32>
      %cst_6 = arith.constant 0.000000e+00 : f32
      %cst_7 = arith.constant 1.000000e+00 : f32
      %23 = vector.broadcast %cst_6 : f32 to vector<1x256xf32>
      %24 = arith.maximumf %23, %22 : vector<1x256xf32>
      %25 = vector.broadcast %cst_7 : f32 to vector<1x256xf32>
      %26 = arith.minimumf %25, %24 : vector<1x256xf32>
      %cst_8 = arith.constant 1.600000e+01 : f32
      %27 = vector.broadcast %cst_8 : f32 to vector<1x256xf32>
      %28 = arith.subf %27, %18 : vector<1x256xf32>
      %cst_9 = arith.constant 0.000000e+00 : f32
      %cst_10 = arith.constant 1.000000e+00 : f32
      %29 = vector.broadcast %cst_9 : f32 to vector<1x256xf32>
      %30 = arith.maximumf %29, %28 : vector<1x256xf32>
      %31 = vector.broadcast %cst_10 : f32 to vector<1x256xf32>
      %32 = arith.minimumf %31, %30 : vector<1x256xf32>
      %33 = arith.mulf %26, %32 : vector<1x256xf32>
      %cst_11 = arith.constant 1.000000e+00 : f32
      %34 = vector.broadcast %cst_11 : f32 to vector<1x256xf32>
      %35 = arith.addf %20, %34 : vector<1x256xf32>
      %cst_12 = arith.constant 0.000000e+00 : f32
      %cst_13 = arith.constant 1.000000e+00 : f32
      %36 = vector.broadcast %cst_12 : f32 to vector<1x256xf32>
      %37 = arith.maximumf %36, %35 : vector<1x256xf32>
      %38 = vector.broadcast %cst_13 : f32 to vector<1x256xf32>
      %39 = arith.minimumf %38, %37 : vector<1x256xf32>
      %40 = arith.mulf %33, %39 : vector<1x256xf32>
      %cst_14 = arith.constant 1.600000e+01 : f32
      %41 = vector.broadcast %cst_14 : f32 to vector<1x256xf32>
      %42 = arith.subf %41, %20 : vector<1x256xf32>
      %cst_15 = arith.constant 0.000000e+00 : f32
      %cst_16 = arith.constant 1.000000e+00 : f32
      %43 = vector.broadcast %cst_15 : f32 to vector<1x256xf32>
      %44 = arith.maximumf %43, %42 : vector<1x256xf32>
      %45 = vector.broadcast %cst_16 : f32 to vector<1x256xf32>
      %46 = arith.minimumf %45, %44 : vector<1x256xf32>
      %47 = arith.mulf %40, %46 : vector<1x256xf32>
      %cst_17 = arith.constant 9.990000e-01 : f32
      %48 = vector.broadcast %cst_17 : f32 to vector<1x256xf32>
      %49 = arith.cmpf ogt, %47, %48 : vector<1x256xf32>
      %cst_18 = arith.constant 1.000000e+00 : f32
      %cst_19 = arith.constant 0.000000e+00 : f32
      %50 = vector.broadcast %cst_18 : f32 to vector<1x256xf32>
      %51 = vector.broadcast %cst_19 : f32 to vector<1x256xf32>
      %52 = arith.select %49, %50, %51 : vector<1x256xi1>, vector<1x256xf32>
      %c0_20 = arith.constant 0 : index
      %c0_21 = arith.constant 0 : index
      %c0_22 = arith.constant 0 : index
      %53 = vector.load %arg9[%c0_20, %c0_21, %c0_22] : memref<1x1x256xf32, #tpu.memory_space<vmem>>, vector<1x1x256xf32>
      %54 = vector.shape_cast %53 : vector<1x1x256xf32> to vector<1x256xf32>
      %55 = arith.mulf %52, %54 : vector<1x256xf32>
      %c0_23 = arith.constant 0 : index
      %c0_24 = arith.constant 0 : index
      %56 = vector.load %arg11[%c0_23, %c0_24] : memref<4x256xf32, #tpu.memory_space<vmem>>, vector<4x256xf32>
      %c0_25 = arith.constant 0 : index
      %c0_26 = arith.constant 0 : index
      %c0_27 = arith.constant 0 : index
      %57 = vector.load %arg8[%c0_25, %c0_26, %c0_27] : memref<1x4x256xf32, #tpu.memory_space<vmem>>, vector<1x4x256xf32>
      %58 = vector.shape_cast %57 : vector<1x4x256xf32> to vector<4x256xf32>
      %59 = arith.subf %56, %58 : vector<4x256xf32>
      %60 = math.absf %59 : vector<4x256xf32>
      %61 = vector.broadcast %55 : vector<1x256xf32> to vector<4x256xf32>
      %62 = arith.mulf %61, %60 : vector<4x256xf32>
      %cst_28 = arith.constant dense<0.000000e+00> : vector<256xf32>
      %63 = vector.multi_reduction <add>, %62, %cst_28 [0] : vector<4x256xf32> to vector<256xf32>
      %64 = vector.shape_cast %63 : vector<256xf32> to vector<1x256xf32>
      %65 = vector.shape_cast %64 : vector<1x256xf32> to vector<1x1x1x256xf32>
      %c0_29 = arith.constant 0 : index
      %c0_30 = arith.constant 0 : index
      %c0_31 = arith.constant 0 : index
      %c0_32 = arith.constant 0 : index
      %66 = vector.load %arg10[%c0_29, %c0_30, %c0_31, %c0_32] : memref<1x1x1x256xf32, #tpu.memory_space<vmem>>, vector<1x1x1x256xf32>
      tpu.vector_store %arg10[%c0_29, %c0_30, %c0_31, %c0_32], %65 {strides = array<i32>} : memref<1x1x1x256xf32, #tpu.memory_space<vmem>>, vector<1x1x1x256xf32>,
    } else {
    }
    return
  }
  func.func @transform_0(%arg0: i32, %arg1: i32, %arg2: i32, %arg3: memref<2x1xi32, #tpu.memory_space<smem>>, %arg4: memref<2x1xi32, #tpu.memory_space<smem>>) -> (i32, i32, i32) {
    %c0_i32 = arith.constant 0 : i32
    %c0_i32_0 = arith.constant 0 : i32
    return %arg0, %c0_i32, %arg1 : i32, i32, i32
  }
  func.func @transform_1(%arg0: i32, %arg1: i32, %arg2: i32, %arg3: memref<2x1xi32, #tpu.memory_space<smem>>, %arg4: memref<2x1xi32, #tpu.memory_space<smem>>) -> (i32, i32) {
    %0 = arith.index_cast %arg0 : i32 to index
    %1 = arith.index_cast %arg1 : i32 to index
    %2 = memref.load %arg3[%0, %1] : memref<2x1xi32, #tpu.memory_space<smem>>
    %3 = arith.addi %2, %arg2 : i32
    %c0_i32 = arith.constant 0 : i32
    %4 = arith.minsi %3, %c0_i32 : i32
    %c0_i32_0 = arith.constant 0 : i32
    %c0_i32_1 = arith.constant 0 : i32
    return %4, %c0_i32_0 : i32, i32
  }
  func.func @transform_2(%arg0: i32, %arg1: i32, %arg2: i32, %arg3: memref<2x1xi32, #tpu.memory_space<smem>>, %arg4: memref<2x1xi32, #tpu.memory_space<smem>>) -> (i32, i32, i32) {
    %0 = arith.index_cast %arg0 : i32 to index
    %1 = arith.index_cast %arg1 : i32 to index
    %2 = memref.load %arg3[%0, %1] : memref<2x1xi32, #tpu.memory_space<smem>>
    %3 = arith.addi %2, %arg2 : i32
    %c0_i32 = arith.constant 0 : i32
    %4 = arith.minsi %3, %c0_i32 : i32
    %c0_i32_0 = arith.constant 0 : i32
    %c0_i32_1 = arith.constant 0 : i32
    return %arg0, %c0_i32_0, %4 : i32, i32, i32
  }
  func.func @transform_3(%arg0: i32, %arg1: i32, %arg2: i32, %arg3: memref<2x1xi32, #tpu.memory_space<smem>>, %arg4: memref<2x1xi32, #tpu.memory_space<smem>>) -> (i32, i32, i32) {
    %c0_i32 = arith.constant 0 : i32
    %c0_i32_0 = arith.constant 0 : i32
    return %arg0, %c0_i32, %arg1 : i32, i32, i32
  }
  func.func @transform_4(%arg0: i32, %arg1: i32, %arg2: i32, %arg3: memref<2x1xi32, #tpu.memory_space<smem>>, %arg4: memref<2x1xi32, #tpu.memory_space<smem>>) -> (i32, i32, i32) {
    %c0_i32 = arith.constant 0 : i32
    %c0_i32_0 = arith.constant 0 : i32
    return %arg0, %c0_i32, %arg1 : i32, i32, i32
  }
  func.func @transform_5(%arg0: i32, %arg1: i32, %arg2: i32, %arg3: memref<2x1xi32, #tpu.memory_space<smem>>, %arg4: memref<2x1xi32, #tpu.memory_space<smem>>) -> (i32, i32, i32, i32) {
    %c0_i32 = arith.constant 0 : i32
    %c0_i32_0 = arith.constant 0 : i32
    %c0_i32_1 = arith.constant 0 : i32
    return %arg0, %arg1, %c0_i32, %c0_i32_0 : i32, i32, i32, i32
  }
}

</mosaic_0001>

<llo_original>
// kernel: tpu_custom_call.1
$region0: #{tpu_custom_call.1}
  #allocation0 [shape = 'u32[]', space=smem, size = 0x4, offset = 0x4, fixed_abs, tag = 'smem constant byte address 0x4 - core index']
  #allocation1 [shape = 'u32[144,128]{1,0:T(1,128)}', space=vmem, size = 0x12000, scoped, tag = 'internal scratch']
  #allocation2 [shape = 'f32[4,256]{1,0:T(4,128)}', space=vmem, size = 0x1000, scoped, tag = 'scratch operand']
  #allocation3 [shape = 's32[1]{0}', space=sflag, size = 0x4, scoped, tag = 'scoped memory for tpu_custom_call.1']
  #allocation4 [shape = 'u8[1024]{0}', space=smem, size = 0x400, scoped, tag = 'prefetched SMEM operand 0']
  #allocation5 [shape = 'u8[1024]{0}', space=smem, size = 0x400, scoped, tag = 'prefetched SMEM operand 1']
  %s0 = inlined_call_operand.vmem [shape: s32[2,1], index: 0, kind: input, shape index: {}]
  %s1 = inlined_call_operand.vmem [shape: s32[2,1], index: 1, kind: input, shape index: {}]
  %s2 = inlined_call_operand.vmem [shape: f32[2,2,256], index: 2, kind: input, shape index: {}]
  %s3 = inlined_call_operand.vmem [shape: f32[256,2], index: 3, kind: input, shape index: {}]
  %s4 = inlined_call_operand.vmem [shape: f32[2,4,256], index: 4, kind: input, shape index: {}]
  %s5 = inlined_call_operand.vmem [shape: f32[2,4,256], index: 5, kind: input, shape index: {}]
  %s6 = inlined_call_operand.vmem [shape: f32[2,1,256], index: 6, kind: input, shape index: {}]
  %s7 = inlined_call_operand.hbm [shape: f32[2,1,1,256], index: 7, kind: output, shape index: {}]
  %s8 = sld [smem:[#allocation0]]
  $region65: #{tpu_custom_call.1} parent=0
    _
  %s10 = ssub.s32 1, %s8
  %s11 = scalar_select 0, %s10, %s8
  %s12 = sshll.u32 %s0, 4
  %s13 = int_to_ptr.vmem [resolvable:$true] %s12
  %15 = dma.vmem_to_smem %s13, 32, [#allocation4], [#allocation3]
  %s16 = sshll.u32 %s1, 4
  %s17 = int_to_ptr.vmem [resolvable:$true] %s16
  %19 = dma.vmem_to_smem %s17, 32, [#allocation5], [#allocation3]
  %20 = dma.done [#allocation3], 64
  %21 = sfence
  $region1: #{tpu_custom_call.1} parent=0
    #allocation6 [shape = 'u8[2048]{0}', space=vmem, size = 0x800, scoped, tag = 'output window, operand 0']
    #allocation7 [shape = 's32[2]{0}', space=sflag, size = 0x8, scoped, tag = 'scoped memory for tpu_custom_call.1']
    %22 = vsyncpa [#allocation7], 0
    %s23 = scalar_lea.sflag [#allocation7], 1
    %24 = vsyncpa %s23, 0
    loop: start=0, step=1, limit=4
    $region2: #{tpu_custom_call.1} parent=1 // loop_pre_header
      _
    $region3: #{tpu_custom_call.1} parent=1 // loop_header
      %s26 = sphi 0, %s30
      %p27 = scmp.ge.s32.totalorder %s26, 4
      %s33 = sphi 0, %s52
      %s34 = sphi 0, %s48
      %s35 = sphi 0, %s44
      %s36 = sphi 0, %s33
      %s37 = sphi 0, %s34
      %s38 = sphi 0, %s35
      %s39 = sphi 0, %s36
      %s40 = sphi 0, %s37
      %s41 = sphi 0, %s38
      %s57 = sphi 0, %s59
      %s60 = sphi 0, %s57
      %s61 = sphi 0, %s60
      %s77 = sphi 0, %s61
      %s105 = sphi 0, %s107
      %s108 = sphi 0, %s105
      %s109 = sphi 0, %s108
      %s125 = sphi 0, %s109
      %s155 = sphi 0, %s157
      %s158 = sphi 0, %s155
      %s159 = sphi 0, %s158
      %s175 = sphi 0, %s159
      %s183 = sphi 0, %s185
      %s186 = sphi 0, %s183
      %s187 = sphi 0, %s186
      %s203 = sphi 0, %s187
      %s211 = sphi 0, %s213
      %s214 = sphi 0, %s211
      %s215 = sphi 0, %s214
      %s231 = sphi 0, %s215
      %s239 = sphi 0, %s241
      %s242 = sphi 0, %s239
      %s243 = sphi 0, %s242
      %s259 = sphi 0, %s243
    $region4: #{tpu_custom_call.1} parent=1 // loop_header_branch
      %29 = sbr.rel (%p27) target = $region8
    $region5: #{tpu_custom_call.1} parent=1 // loop_body
      %s31 = ssub.s32 %s26, 1
      %s32 = ssub.s32 %s26, 2
      %s42 = sadd.s32 1, %s35
      %p43 = scmp.ge.s32.totalorder %s42, 1
      %s44 = scalar_select %p43, 0, %s42
      %s45 = sadd.s32 1, %s34
      %s46 = scalar_select %p43, %s45, %s34
      %p47 = scmp.ge.s32.totalorder %s46, 1
      %s48 = scalar_select %p47, 0, %s46
      %s49 = sadd.s32 1, %s33
      %s50 = scalar_select %p47, %s49, %s33
      %p51 = scmp.ge.s32.totalorder %s50, 2
      %s52 = scalar_select %p51, 0, %s50
      %s53 = ssub.s32 %s33, %s52
      %s54 = ssub.s32 %s34, %s48
      %s55 = sor.u32 %s53, %s54
      %p56 = scmp.eq.s32.totalorder %s55, 0
      %s58 = sadd.s32 %s57, 1
      %s59 = scalar_select %p56, %s57, %s58
      %p62 = pneg %p56
      %p63 = scmp.eq.s32.totalorder %s26, 1
      %p64 = por %p62, %p63
      %p65 = scmp.ne.s32.totalorder %s57, %s60
      %p66 = scmp.eq.s32.totalorder %s26, 0
      %p67 = por %p65, %p66
      %p68 = scmp.ne.s32.totalorder %s57, %s60
      %p69 = scmp.eq.s32.totalorder %s31, 1
      %p70 = por %p68, %p69
      %p71 = scmp.ne.s32.totalorder %s60, %s61
      %p72 = scmp.eq.s32.totalorder %s31, 0
      %p73 = por %p71, %p72
      %p74 = scmp.ne.s32.totalorder %s60, %s61
      %p75 = scmp.eq.s32.totalorder %s32, 1
      %p76 = por %p74, %p75
      %p78 = scmp.ne.s32.totalorder %s61, %s77
      %p79 = scmp.eq.s32.totalorder %s32, 0
      %p80 = por %p78, %p79
      %s81 = sshra.s32 %s34, 7
      %s82 = sand.u32 %s34, 127
      %s83 = sadd.s32 %s81, %s33
      %s84 = smul.u32 %s83, 128
      %s85 = sshra.s32 %s34, 7
      %s86 = sand.u32 %s34, 127
      %s87 = sadd.s32 %s84, %s86
      %s88 = sld [smem:[#allocation4 + %s87]]
      %s89 = sadd.s32 %s88, %s35
      %p90 = scmp.lt.s32.totalorder %s89, 0
      %s91 = scalar_select %p90, %s89, 0
      %s92 = sshra.s32 %s48, 7
      %s93 = sand.u32 %s48, 127
      %s94 = sadd.s32 %s92, %s52
      %s95 = smul.u32 %s94, 128
      %s96 = sshra.s32 %s48, 7
      %s97 = sand.u32 %s48, 127
      %s98 = sadd.s32 %s95, %s97
      %s99 = sld [smem:[#allocation4 + %s98]]
      %s100 = sadd.s32 %s99, %s44
      %p101 = scmp.lt.s32.totalorder %s100, 0
      %s102 = scalar_select %p101, %s100, 0
      %s103 = ssub.s32 %s91, %s102
      %p104 = scmp.eq.s32.totalorder %s103, 0
      %s106 = sadd.s32 %s105, 1
      %s107 = scalar_select %p104, %s105, %s106
      %p110 = pneg %p104
      %p111 = scmp.eq.s32.totalorder %s26, 1
      %p112 = por %p110, %p111
      %p113 = scmp.ne.s32.totalorder %s105, %s108
      %p114 = scmp.eq.s32.totalorder %s26, 0
      %p115 = por %p113, %p114
      %p116 = scmp.ne.s32.totalorder %s105, %s108
      %p117 = scmp.eq.s32.totalorder %s31, 1
      %p118 = por %p116, %p117
      %p119 = scmp.ne.s32.totalorder %s108, %s109
      %p120 = scmp.eq.s32.totalorder %s31, 0
      %p121 = por %p119, %p120
      %p122 = scmp.ne.s32.totalorder %s108, %s109
      %p123 = scmp.eq.s32.totalorder %s32, 1
      %p124 = por %p122, %p123
      %p126 = scmp.ne.s32.totalorder %s109, %s125
      %p127 = scmp.eq.s32.totalorder %s32, 0
      %p128 = por %p126, %p127
      %s129 = sshra.s32 %s34, 7
      %s130 = sand.u32 %s34, 127
      %s131 = sadd.s32 %s129, %s33
      %s132 = smul.u32 %s131, 128
      %s133 = sshra.s32 %s34, 7
      %s134 = sand.u32 %s34, 127
      %s135 = sadd.s32 %s132, %s134
      %s136 = sld [smem:[#allocation4 + %s135]]
      %s137 = sadd.s32 %s136, %s35
      %p138 = scmp.lt.s32.totalorder %s137, 0
      %s139 = scalar_select %p138, %s137, 0
      %s140 = sshra.s32 %s48, 7
      %s141 = sand.u32 %s48, 127
      %s142 = sadd.s32 %s140, %s52
      %s143 = smul.u32 %s142, 128
      %s144 = sshra.s32 %s48, 7
      %s145 = sand.u32 %s48, 127
      %s146 = sadd.s32 %s143, %s145
      %s147 = sld [smem:[#allocation4 + %s146]]
      %s148 = sadd.s32 %s147, %s44
      %p149 = scmp.lt.s32.totalorder %s148, 0
      %s150 = scalar_select %p149, %s148, 0
      %s151 = ssub.s32 %s33, %s52
      %s152 = ssub.s32 %s139, %s150
      %s153 = sor.u32 %s151, %s152
      %p154 = scmp.eq.s32.totalorder %s153, 0
      %s156 = sadd.s32 %s155, 1
      %s157 = scalar_select %p154, %s155, %s156
      %p160 = pneg %p154
      %p161 = scmp.eq.s32.totalorder %s26, 1
      %p162 = por %p160, %p161
      %p163 = scmp.ne.s32.totalorder %s155, %s158
      %p164 = scmp.eq.s32.totalorder %s26, 0
      %p165 = por %p163, %p164
      %p166 = scmp.ne.s32.totalorder %s155, %s158
      %p167 = scmp.eq.s32.totalorder %s31, 1
      %p168 = por %p166, %p167
      %p169 = scmp.ne.s32.totalorder %s158, %s159
      %p170 = scmp.eq.s32.totalorder %s31, 0
      %p171 = por %p169, %p170
      %p172 = scmp.ne.s32.totalorder %s158, %s159
      %p173 = scmp.eq.s32.totalorder %s32, 1
      %p174 = por %p172, %p173
      %p176 = scmp.ne.s32.totalorder %s159, %s175
      %p177 = scmp.eq.s32.totalorder %s32, 0
      %p178 = por %p176, %p177
      %s179 = ssub.s32 %s33, %s52
      %s180 = ssub.s32 %s34, %s48
      %s181 = sor.u32 %s179, %s180
      %p182 = scmp.eq.s32.totalorder %s181, 0
      %s184 = sadd.s32 %s183, 1
      %s185 = scalar_select %p182, %s183, %s184
      %p188 = pneg %p182
      %p189 = scmp.eq.s32.totalorder %s26, 1
      %p190 = por %p188, %p189
      %p191 = scmp.ne.s32.totalorder %s183, %s186
      %p192 = scmp.eq.s32.totalorder %s26, 0
      %p193 = por %p191, %p192
      %p194 = scmp.ne.s32.totalorder %s183, %s186
      %p195 = scmp.eq.s32.totalorder %s31, 1
      %p196 = por %p194, %p195
      %p197 = scmp.ne.s32.totalorder %s186, %s187
      %p198 = scmp.eq.s32.totalorder %s31, 0
      %p199 = por %p197, %p198
      %p200 = scmp.ne.s32.totalorder %s186, %s187
      %p201 = scmp.eq.s32.totalorder %s32, 1
      %p202 = por %p200, %p201
      %p204 = scmp.ne.s32.totalorder %s187, %s203
      %p205 = scmp.eq.s32.totalorder %s32, 0
      %p206 = por %p204, %p205
      %s207 = ssub.s32 %s33, %s52
      %s208 = ssub.s32 %s34, %s48
      %s209 = sor.u32 %s207, %s208
      %p210 = scmp.eq.s32.totalorder %s209, 0
      %s212 = sadd.s32 %s211, 1
      %s213 = scalar_select %p210, %s211, %s212
      %p216 = pneg %p210
      %p217 = scmp.eq.s32.totalorder %s26, 1
      %p218 = por %p216, %p217
      %p219 = scmp.ne.s32.totalorder %s211, %s214
      %p220 = scmp.eq.s32.totalorder %s26, 0
      %p221 = por %p219, %p220
      %p222 = scmp.ne.s32.totalorder %s211, %s214
      %p223 = scmp.eq.s32.totalorder %s31, 1
      %p224 = por %p222, %p223
      %p225 = scmp.ne.s32.totalorder %s214, %s215
      %p226 = scmp.eq.s32.totalorder %s31, 0
      %p227 = por %p225, %p226
      %p228 = scmp.ne.s32.totalorder %s214, %s215
      %p229 = scmp.eq.s32.totalorder %s32, 1
      %p230 = por %p228, %p229
      %p232 = scmp.ne.s32.totalorder %s215, %s231
      %p233 = scmp.eq.s32.totalorder %s32, 0
      %p234 = por %p232, %p233
      %s235 = ssub.s32 %s33, %s52
      %s236 = ssub.s32 %s34, %s48
      %s237 = sor.u32 %s235, %s236
      %p238 = scmp.eq.s32.totalorder %s237, 0
      %s240 = sadd.s32 %s239, 1
      %s241 = scalar_select %p238, %s239, %s240
      %p244 = pneg %p238
      %p245 = scmp.eq.s32.totalorder %s26, 1
      %p246 = por %p244, %p245
      %p247 = scmp.ne.s32.totalorder %s239, %s242
      %p248 = scmp.eq.s32.totalorder %s26, 0
      %p249 = por %p247, %p248
      %p250 = scmp.ne.s32.totalorder %s239, %s242
      %p251 = scmp.eq.s32.totalorder %s31, 1
      %p252 = por %p250, %p251
      %p253 = scmp.ne.s32.totalorder %s242, %s243
      %p254 = scmp.eq.s32.totalorder %s31, 0
      %p255 = por %p253, %p254
      %p256 = scmp.ne.s32.totalorder %s242, %s243
      %p257 = scmp.eq.s32.totalorder %s32, 1
      %p258 = por %p256, %p257
      %p260 = scmp.ne.s32.totalorder %s243, %s259
      %p261 = scmp.eq.s32.totalorder %s32, 0
      %p262 = por %p260, %p261
      %p263 = scmp.le.s32.totalorder 1, %s26
      %p264 = scmp.lt.s32.totalorder %s26, 3
      %p265 = pnand %p263, %p264
      %p266 = pneg %p265
      // Predicated region
      $region9: #{tpu_custom_call.1} parent=5 // pred_check
        _
      $region10: #{tpu_custom_call.1} parent=5 // pred_check_branch
        %268 = sbr.rel (%p265) target = $region12
      $region11: #{tpu_custom_call.1} parent=5 // pred_region
        %s269 = ssub.s32 %s26, 1
      $region12: #{tpu_custom_call.1} parent=5 // pred_fallthru
        _
      %p270 = scmp.lt.s32.totalorder %s26, 2
      // Predicated region
      $region13: #{tpu_custom_call.1} parent=5 // pred_check
        %p271 = pneg %p270
      $region14: #{tpu_custom_call.1} parent=5 // pred_check_branch
        %273 = sbr.rel (%p271) target = $region16
      $region15: #{tpu_custom_call.1} parent=5 // pred_region
        // Predicated region
        $region17: #{tpu_custom_call.1} parent=15 // pred_check
          %p274 = pneg %p67
        $region18: #{tpu_custom_call.1} parent=15 // pred_check_branch
          %276 = sbr.rel (%p274) target = $region20
        $region19: #{tpu_custom_call.1} parent=15 // pred_region
          %s277 = smul.u32 2, %s34
          %p278 = scmp.lt.s32.totalorder %s33, 1
          %s279 = scalar_select %p278, %s33, 1
          %p280 = scmp.lt.s32.totalorder %s277, 1
          %s281 = scalar_select %p280, %s277, 1
          %s282 = smul.addr %s279, 2
          %s283 = sadd.s32 %s281, %s282
          %s284 = smul.addr %s283, 2
          %s285 = scalar_lea.vmem %s2, %s284
          %s286 = smul.u32 2, %s34
        $region20: #{tpu_custom_call.1} parent=15 // pred_fallthru
          _
        // Predicated region
        $region21: #{tpu_custom_call.1} parent=15 // pred_check
          %p287 = pneg %p115
        $region22: #{tpu_custom_call.1} parent=15 // pred_check_branch
          %289 = sbr.rel (%p287) target = $region24
        $region23: #{tpu_custom_call.1} parent=15 // pred_region
          %s290 = sshra.s32 %s34, 7
          %s291 = sand.u32 %s34, 127
          %s292 = sadd.s32 %s290, %s33
          %s293 = smul.u32 %s292, 128
          %s294 = sshra.s32 %s34, 7
          %s295 = sand.u32 %s34, 127
          %s296 = sadd.s32 %s293, %s295
          %s297 = sld [smem:[#allocation4 + %s296]]
          %s298 = sadd.s32 %s297, %s35
          %p299 = scmp.lt.s32.totalorder %s298, 0
          %s300 = scalar_select %p299, %s298, 0
          %s301 = smul.u32 32, %s300
          %p302 = scmp.lt.s32.totalorder %s301, 31
          %s303 = scalar_select %p302, %s301, 31
          %s304 = smul.addr %s303, 8
          %s305 = scalar_lea.vmem %s3, %s304
          %s306 = sshra.s32 %s34, 7
          %s307 = sand.u32 %s34, 127
          %s308 = sadd.s32 %s306, %s33
          %s309 = smul.u32 %s308, 128
          %s310 = sshra.s32 %s34, 7
          %s311 = sand.u32 %s34, 127
          %s312 = sadd.s32 %s309, %s311
          %s313 = sld [smem:[#allocation4 + %s312]]
          %s314 = sadd.s32 %s313, %s35
          %p315 = scmp.lt.s32.totalorder %s314, 0
          %s316 = scalar_select %p315, %s314, 0
          %s317 = smul.u32 32, %s316
        $region24: #{tpu_custom_call.1} parent=15 // pred_fallthru
          _
        // Predicated region
        $region25: #{tpu_custom_call.1} parent=15 // pred_check
          %p318 = pneg %p165
        $region26: #{tpu_custom_call.1} parent=15 // pred_check_branch
          %320 = sbr.rel (%p318) target = $region28
        $region27: #{tpu_custom_call.1} parent=15 // pred_region
          %s321 = sshra.s32 %s34, 7
          %s322 = sand.u32 %s34, 127
          %s323 = sadd.s32 %s321, %s33
          %s324 = smul.u32 %s323, 128
          %s325 = sshra.s32 %s34, 7
          %s326 = sand.u32 %s34, 127
          %s327 = sadd.s32 %s324, %s326
          %s328 = sld [smem:[#allocation4 + %s327]]
          %s329 = sadd.s32 %s328, %s35
          %p330 = scmp.lt.s32.totalorder %s329, 0
          %s331 = scalar_select %p330, %s329, 0
          %s332 = smul.u32 2, %s331
          %p333 = scmp.lt.s32.totalorder %s33, 1
          %s334 = scalar_select %p333, %s33, 1
          %p335 = scmp.lt.s32.totalorder %s332, 1
          %s336 = scalar_select %p335, %s332, 1
          %s337 = smul.addr %s334, 2
          %s338 = sadd.s32 %s336, %s337
          %s339 = smul.addr %s338, 4
          %s340 = scalar_lea.vmem %s4, %s339
          %s341 = sshra.s32 %s34, 7
          %s342 = sand.u32 %s34, 127
          %s343 = sadd.s32 %s341, %s33
          %s344 = smul.u32 %s343, 128
          %s345 = sshra.s32 %s34, 7
          %s346 = sand.u32 %s34, 127
          %s347 = sadd.s32 %s344, %s346
          %s348 = sld [smem:[#allocation4 + %s347]]
          %s349 = sadd.s32 %s348, %s35
          %p350 = scmp.lt.s32.totalorder %s349, 0
          %s351 = scalar_select %p350, %s349, 0
          %s352 = smul.u32 2, %s351
        $region28: #{tpu_custom_call.1} parent=15 // pred_fallthru
          _
        // Predicated region
        $region29: #{tpu_custom_call.1} parent=15 // pred_check
          %p353 = pneg %p193
        $region30: #{tpu_custom_call.1} parent=15 // pred_check_branch
          %355 = sbr.rel (%p353) target = $region32
        $region31: #{tpu_custom_call.1} parent=15 // pred_region
          %s356 = smul.u32 2, %s34
          %p357 = scmp.lt.s32.totalorder %s33, 1
          %s358 = scalar_select %p357, %s33, 1
          %p359 = scmp.lt.s32.totalorder %s356, 1
          %s360 = scalar_select %p359, %s356, 1
          %s361 = smul.addr %s358, 2
          %s362 = sadd.s32 %s360, %s361
          %s363 = smul.addr %s362, 4
          %s364 = scalar_lea.vmem %s5, %s363
          %s365 = smul.u32 2, %s34
        $region32: #{tpu_custom_call.1} parent=15 // pred_fallthru
          _
        // Predicated region
        $region33: #{tpu_custom_call.1} parent=15 // pred_check
          %p366 = pneg %p221
        $region34: #{tpu_custom_call.1} parent=15 // pred_check_branch
          %368 = sbr.rel (%p366) target = $region36
        $region35: #{tpu_custom_call.1} parent=15 // pred_region
          %s369 = smul.u32 2, %s34
          %p370 = scmp.lt.s32.totalorder %s33, 1
          %s371 = scalar_select %p370, %s33, 1
          %p372 = scmp.lt.s32.totalorder %s369, 1
          %s373 = scalar_select %p372, %s369, 1
          %s374 = smul.addr %s371, 2
          %s375 = sadd.s32 %s373, %s374
          %s376 = scalar_lea.vmem %s6, %s375
          %s377 = smul.u32 2, %s34
        $region36: #{tpu_custom_call.1} parent=15 // pred_fallthru
          _
      $region16: #{tpu_custom_call.1} parent=5 // pred_fallthru
        _
      %p378 = scmp.le.s32.totalorder 1, %s26
      %p379 = scmp.lt.s32.totalorder %s26, 3
      %p380 = pnand %p378, %p379
      %p381 = pneg %p380
      // Predicated region
      $region37: #{tpu_custom_call.1} parent=5 // pred_check
        _
      $region38: #{tpu_custom_call.1} parent=5 // pred_check_branch
        %383 = sbr.rel (%p380) target = $region40
      $region39: #{tpu_custom_call.1} parent=5 // pred_region
        %s384 = ssub.s32 %s26, 1
        %s385 = smul.u32 2, %s37
        %p386 = scmp.lt.s32.totalorder %s36, 1
        %s387 = scalar_select %p386, %s36, 1
        %p388 = scmp.lt.s32.totalorder %s385, 1
        %s389 = scalar_select %p388, %s385, 1
        %s390 = smul.addr %s387, 2
        %s391 = sadd.s32 %s389, %s390
        %s392 = smul.addr %s391, 2
        %s393 = scalar_lea.vmem %s2, %s392
        %p394 = pneg %p73
        %p395 = pneg %p70
        %s396 = sshra.s32 %s37, 7
        %s397 = sand.u32 %s37, 127
        %s398 = sadd.s32 %s396, %s36
        %s399 = smul.u32 %s398, 128
        %s400 = sshra.s32 %s37, 7
        %s401 = sand.u32 %s37, 127
        %s402 = sadd.s32 %s399, %s401
        %s403 = sld [smem:[#allocation4 + %s402]]
        %s404 = sadd.s32 %s403, %s38
        %p405 = scmp.lt.s32.totalorder %s404, 0
        %s406 = scalar_select %p405, %s404, 0
        %s407 = smul.u32 32, %s406
        %p408 = scmp.lt.s32.totalorder %s407, 31
        %s409 = scalar_select %p408, %s407, 31
        %s410 = smul.addr %s409, 8
        %s411 = scalar_lea.vmem %s3, %s410
        %p412 = pneg %p121
        %p413 = pneg %p118
        %s414 = sshra.s32 %s37, 7
        %s415 = sand.u32 %s37, 127
        %s416 = sadd.s32 %s414, %s36
        %s417 = smul.u32 %s416, 128
        %s418 = sshra.s32 %s37, 7
        %s419 = sand.u32 %s37, 127
        %s420 = sadd.s32 %s417, %s419
        %s421 = sld [smem:[#allocation4 + %s420]]
        %s422 = sadd.s32 %s421, %s38
        %p423 = scmp.lt.s32.totalorder %s422, 0
        %s424 = scalar_select %p423, %s422, 0
        %s425 = smul.u32 2, %s424
        %p426 = scmp.lt.s32.totalorder %s36, 1
        %s427 = scalar_select %p426, %s36, 1
        %p428 = scmp.lt.s32.totalorder %s425, 1
        %s429 = scalar_select %p428, %s425, 1
        %s430 = smul.addr %s427, 2
        %s431 = sadd.s32 %s429, %s430
        %s432 = smul.addr %s431, 4
        %s433 = scalar_lea.vmem %s4, %s432
        %p434 = pneg %p171
        %p435 = pneg %p168
        %s436 = smul.u32 2, %s37
        %p437 = scmp.lt.s32.totalorder %s36, 1
        %s438 = scalar_select %p437, %s36, 1
        %p439 = scmp.lt.s32.totalorder %s436, 1
        %s440 = scalar_select %p439, %s436, 1
        %s441 = smul.addr %s438, 2
        %s442 = sadd.s32 %s440, %s441
        %s443 = smul.addr %s442, 4
        %s444 = scalar_lea.vmem %s5, %s443
        %p445 = pneg %p199
        %p446 = pneg %p196
        %s447 = smul.u32 2, %s37
        %p448 = scmp.lt.s32.totalorder %s36, 1
        %s449 = scalar_select %p448, %s36, 1
        %p450 = scmp.lt.s32.totalorder %s447, 1
        %s451 = scalar_select %p450, %s447, 1
        %s452 = smul.addr %s449, 2
        %s453 = sadd.s32 %s451, %s452
        %s454 = scalar_lea.vmem %s6, %s453
        %p455 = pneg %p227
        %p456 = pneg %p224
        %p457 = pneg %p255
        %p458 = pneg %p252
        %s459 = sand.u32 %s242, 1
        %s460 = scalar_lea.sflag [#allocation7], %s459
        %s461 = sand.u32 %s242, 1
        %s462 = smul.addr %s461, 2
        %s463 = scalar_lea.vmem [#allocation6], %s462
        %s464 = smul.u32 2, %s37
        %p465 = scmp.lt.s32.totalorder %s36, 1
        %s466 = scalar_select %p465, %s36, 1
        %p467 = scmp.lt.s32.totalorder %s464, 1
        %s468 = scalar_select %p467, %s464, 1
        %s469 = smul.addr %s466, 2
        %s470 = sadd.s32 %s468, %s469
        %s471 = smul.addr %s470, 2
        %s472 = scalar_lea.vmem %s2, %s471
        %s473 = smul.u32 2, %s37
        %s474 = sshra.s32 %s37, 7
        %s475 = sand.u32 %s37, 127
        %s476 = sadd.s32 %s474, %s36
        %s477 = smul.u32 %s476, 128
        %s478 = sshra.s32 %s37, 7
        %s479 = sand.u32 %s37, 127
        %s480 = sadd.s32 %s477, %s479
        %s481 = sld [smem:[#allocation4 + %s480]]
        %s482 = sadd.s32 %s481, %s38
        %p483 = scmp.lt.s32.totalorder %s482, 0
        %s484 = scalar_select %p483, %s482, 0
        %s485 = smul.u32 32, %s484
        %p486 = scmp.lt.s32.totalorder %s485, 31
        %s487 = scalar_select %p486, %s485, 31
        %s488 = smul.addr %s487, 8
        %s489 = scalar_lea.vmem %s3, %s488
        %s490 = sshra.s32 %s37, 7
        %s491 = sand.u32 %s37, 127
        %s492 = sadd.s32 %s490, %s36
        %s493 = smul.u32 %s492, 128
        %s494 = sshra.s32 %s37, 7
        %s495 = sand.u32 %s37, 127
        %s496 = sadd.s32 %s493, %s495
        %s497 = sld [smem:[#allocation4 + %s496]]
        %s498 = sadd.s32 %s497, %s38
        %p499 = scmp.lt.s32.totalorder %s498, 0
        %s500 = scalar_select %p499, %s498, 0
        %s501 = smul.u32 32, %s500
        %s502 = sshra.s32 %s37, 7
        %s503 = sand.u32 %s37, 127
        %s504 = sadd.s32 %s502, %s36
        %s505 = smul.u32 %s504, 128
        %s506 = sshra.s32 %s37, 7
        %s507 = sand.u32 %s37, 127
        %s508 = sadd.s32 %s505, %s507
        %s509 = sld [smem:[#allocation4 + %s508]]
        %s510 = sadd.s32 %s509, %s38
        %p511 = scmp.lt.s32.totalorder %s510, 0
        %s512 = scalar_select %p511, %s510, 0
        %s513 = smul.u32 2, %s512
        %p514 = scmp.lt.s32.totalorder %s36, 1
        %s515 = scalar_select %p514, %s36, 1
        %p516 = scmp.lt.s32.totalorder %s513, 1
        %s517 = scalar_select %p516, %s513, 1
        %s518 = smul.addr %s515, 2
        %s519 = sadd.s32 %s517, %s518
        %s520 = smul.addr %s519, 4
        %s521 = scalar_lea.vmem %s4, %s520
        %s522 = sshra.s32 %s37, 7
        %s523 = sand.u32 %s37, 127
        %s524 = sadd.s32 %s522, %s36
        %s525 = smul.u32 %s524, 128
        %s526 = sshra.s32 %s37, 7
        %s527 = sand.u32 %s37, 127
        %s528 = sadd.s32 %s525, %s527
        %s529 = sld [smem:[#allocation4 + %s528]]
        %s530 = sadd.s32 %s529, %s38
        %p531 = scmp.lt.s32.totalorder %s530, 0
        %s532 = scalar_select %p531, %s530, 0
        %s533 = smul.u32 2, %s532
        %s534 = smul.u32 2, %s37
        %p535 = scmp.lt.s32.totalorder %s36, 1
        %s536 = scalar_select %p535, %s36, 1
        %p537 = scmp.lt.s32.totalorder %s534, 1
        %s538 = scalar_select %p537, %s534, 1
        %s539 = smul.addr %s536, 2
        %s540 = sadd.s32 %s538, %s539
        %s541 = smul.addr %s540, 4
        %s542 = scalar_lea.vmem %s5, %s541
        %s543 = smul.u32 2, %s37
        %s544 = smul.u32 2, %s37
        %p545 = scmp.lt.s32.totalorder %s36, 1
        %s546 = scalar_select %p545, %s36, 1
        %p547 = scmp.lt.s32.totalorder %s544, 1
        %s548 = scalar_select %p547, %s544, 1
        %s549 = smul.addr %s546, 2
        %s550 = sadd.s32 %s548, %s549
        %s551 = scalar_lea.vmem %s6, %s550
        %s552 = smul.u32 2, %s37
        %p555 = scmp.eq.s32.totalorder %s38, 0
        // Predicated region
        $region41: #{tpu_custom_call.1} parent=39 // pred_check
          %p556 = pneg %p555
        $region42: #{tpu_custom_call.1} parent=39 // pred_check_branch
          %558 = sbr.rel (%p556) target = $region44
        $region43: #{tpu_custom_call.1} parent=39 // pred_region
          %559 = vst [vmem:[#allocation2] sm:$0xff] 0.0
        $region44: #{tpu_custom_call.1} parent=39 // pred_fallthru
          _
        %s560 = sshra.s32 %s37, 7
        %s561 = sand.u32 %s37, 127
        %s562 = sadd.s32 %s560, %s36
        %s563 = smul.u32 %s562, 128
        %s564 = sshra.s32 %s37, 7
        %s565 = sand.u32 %s37, 127
        %s566 = sadd.s32 %s563, %s565
        %s567 = sld [smem:[#allocation4 + %s566]]
        %s568 = sadd.s32 %s567, %s38
        %s569 = sld [smem:[#allocation5 + %s566]]
        %p570 = scmp.le.s32.totalorder %s568, %s569
        // Predicated region
        $region45: #{tpu_custom_call.1} parent=39 // pred_check
          %p571 = pneg %p570
        $region46: #{tpu_custom_call.1} parent=39 // pred_check_branch
          %573 = sbr.rel (%p571) target = $region48
        $region47: #{tpu_custom_call.1} parent=39 // pred_region
          %v574 = vld [vmem:[%s472] sm:$0xf]
          %v575 = vld [vmem:[%s489] sm:$0xff]
          %v576 = vld [vmem:[%s489 + $0x8] sm:$0xff]
          %v577 = vld [vmem:[%s489 + $0x10] sm:$0xff]
          %v578 = vld [vmem:[%s489 + $0x18] sm:$0xff]
          %v579 = vld [vmem:[%s489 + $0x20] sm:$0xff]
          %v580 = vld [vmem:[%s489 + $0x28] sm:$0xff]
          %v581 = vld [vmem:[%s489 + $0x30] sm:$0xff]
          %v582 = vld [vmem:[%s489 + $0x38] sm:$0xff]
          %v583 = vld [vmem:[%s489 + $0x40] sm:$0xff]
          %v584 = vld [vmem:[%s489 + $0x48] sm:$0xff]
          %v585 = vld [vmem:[%s489 + $0x50] sm:$0xff]
          %v586 = vld [vmem:[%s489 + $0x58] sm:$0xff]
          %v587 = vld [vmem:[%s489 + $0x60] sm:$0xff]
          %v588 = vld [vmem:[%s489 + $0x68] sm:$0xff]
          %v589 = vld [vmem:[%s489 + $0x70] sm:$0xff]
          %v590 = vld [vmem:[%s489 + $0x78] sm:$0xff]
          %v591 = vld [vmem:[%s489 + $0x80] sm:$0xff]
          %v592 = vld [vmem:[%s489 + $0x88] sm:$0xff]
          %v593 = vld [vmem:[%s489 + $0x90] sm:$0xff]
          %v594 = vld [vmem:[%s489 + $0x98] sm:$0xff]
          %v595 = vld [vmem:[%s489 + $0xa0] sm:$0xff]
          %v596 = vld [vmem:[%s489 + $0xa8] sm:$0xff]
          %v597 = vld [vmem:[%s489 + $0xb0] sm:$0xff]
          %v598 = vld [vmem:[%s489 + $0xb8] sm:$0xff]
          %v599 = vld [vmem:[%s489 + $0xc0] sm:$0xff]
          %v600 = vld [vmem:[%s489 + $0xc8] sm:$0xff]
          %v601 = vld [vmem:[%s489 + $0xd0] sm:$0xff]
          %v602 = vld [vmem:[%s489 + $0xd8] sm:$0xff]
          %v603 = vld [vmem:[%s489 + $0xe0] sm:$0xff]
          %v604 = vld [vmem:[%s489 + $0xe8] sm:$0xff]
          %v605 = vld [vmem:[%s489 + $0xf0] sm:$0xff]
          %v606 = vld [vmem:[%s489 + $0xf8] sm:$0xff]
          %v608 = vlaneseq
          %v609 = vshrl.u32 %v608, 7
          %v610 = vsub.s32 1, %v609
          %v611 = vrot.slane %v574, %v610
          %v612 = vlaneseq
          %v613 = vshrl.u32 %v612, 7
          %v614 = vsub.s32 3, %v613
          %v615 = vrot.slane %v574, %v614
          %v618 = vlaneseq
          %v619 = vshrl.u32 %v618, 7
          %v620 = vsub.s32 1, %v619
          %v621 = vrot.slane %v611, %v620
          %v622 = vlaneseq
          %v623 = vshrl.u32 %v622, 7
          %v624 = vsub.s32 1, %v623
          %v625 = vrot.slane %v615, %v624
          %627 = vset.pattern.permute.xlu0 1
          %628 = vperm.xlu0 %627, %v575
          %v629 = vpop.permute.xlu0 %628
          %632 = vset.pattern.permute.xlu0 1
          %633 = vperm.xlu0 %632, %v576
          %v634 = vpop.permute.xlu0 %633
          %637 = vset.pattern.permute.xlu0 1
          %638 = vperm.xlu0 %637, %v577
          %v639 = vpop.permute.xlu0 %638
          %642 = vset.pattern.permute.xlu0 1
          %643 = vperm.xlu0 %642, %v578
          %v644 = vpop.permute.xlu0 %643
          %647 = vset.pattern.permute.xlu0 1
          %648 = vperm.xlu0 %647, %v579
          %v649 = vpop.permute.xlu0 %648
          %652 = vset.pattern.permute.xlu0 1
          %653 = vperm.xlu0 %652, %v580
          %v654 = vpop.permute.xlu0 %653
          %657 = vset.pattern.permute.xlu0 1
          %658 = vperm.xlu0 %657, %v581
          %v659 = vpop.permute.xlu0 %658
          %662 = vset.pattern.permute.xlu0 1
          %663 = vperm.xlu0 %662, %v582
          %v664 = vpop.permute.xlu0 %663
          %667 = vset.pattern.permute.xlu0 1
          %668 = vperm.xlu0 %667, %v583
          %v669 = vpop.permute.xlu0 %668
          %672 = vset.pattern.permute.xlu0 1
          %673 = vperm.xlu0 %672, %v584
          %v674 = vpop.permute.xlu0 %673
          %677 = vset.pattern.permute.xlu0 1
          %678 = vperm.xlu0 %677, %v585
          %v679 = vpop.permute.xlu0 %678
          %682 = vset.pattern.permute.xlu0 1
          %683 = vperm.xlu0 %682, %v586
          %v684 = vpop.permute.xlu0 %683
          %687 = vset.pattern.permute.xlu0 1
          %688 = vperm.xlu0 %687, %v587
          %v689 = vpop.permute.xlu0 %688
          %692 = vset.pattern.permute.xlu0 1
          %693 = vperm.xlu0 %692, %v588
          %v694 = vpop.permute.xlu0 %693
          %697 = vset.pattern.permute.xlu0 1
          %698 = vperm.xlu0 %697, %v589
          %v699 = vpop.permute.xlu0 %698
          %702 = vset.pattern.permute.xlu0 1
          %703 = vperm.xlu0 %702, %v590
          %v704 = vpop.permute.xlu0 %703
          %707 = vset.pattern.permute.xlu0 1
          %708 = vperm.xlu0 %707, %v591
          %v709 = vpop.permute.xlu0 %708
          %712 = vset.pattern.permute.xlu0 1
          %713 = vperm.xlu0 %712, %v592
          %v714 = vpop.permute.xlu0 %713
          %717 = vset.pattern.permute.xlu0 1
          %718 = vperm.xlu0 %717, %v593
          %v719 = vpop.permute.xlu0 %718
          %722 = vset.pattern.permute.xlu0 1
          %723 = vperm.xlu0 %722, %v594
          %v724 = vpop.permute.xlu0 %723
          %727 = vset.pattern.permute.xlu0 1
          %728 = vperm.xlu0 %727, %v595
          %v729 = vpop.permute.xlu0 %728
          %732 = vset.pattern.permute.xlu0 1
          %733 = vperm.xlu0 %732, %v596
          %v734 = vpop.permute.xlu0 %733
          %737 = vset.pattern.permute.xlu0 1
          %738 = vperm.xlu0 %737, %v597
          %v739 = vpop.permute.xlu0 %738
          %742 = vset.pattern.permute.xlu0 1
          %743 = vperm.xlu0 %742, %v598
          %v744 = vpop.permute.xlu0 %743
          %747 = vset.pattern.permute.xlu0 1
          %748 = vperm.xlu0 %747, %v599
          %v749 = vpop.permute.xlu0 %748
          %752 = vset.pattern.permute.xlu0 1
          %753 = vperm.xlu0 %752, %v600
          %v754 = vpop.permute.xlu0 %753
          %757 = vset.pattern.permute.xlu0 1
          %758 = vperm.xlu0 %757, %v601
          %v759 = vpop.permute.xlu0 %758
          %762 = vset.pattern.permute.xlu0 1
          %763 = vperm.xlu0 %762, %v602
          %v764 = vpop.permute.xlu0 %763
          %767 = vset.pattern.permute.xlu0 1
          %768 = vperm.xlu0 %767, %v603
          %v769 = vpop.permute.xlu0 %768
          %772 = vset.pattern.permute.xlu0 1
          %773 = vperm.xlu0 %772, %v604
          %v774 = vpop.permute.xlu0 %773
          %777 = vset.pattern.permute.xlu0 1
          %778 = vperm.xlu0 %777, %v605
          %v779 = vpop.permute.xlu0 %778
          %782 = vset.pattern.permute.xlu0 1
          %783 = vperm.xlu0 %782, %v606
          %v784 = vpop.permute.xlu0 %783
          %v786 = vsub.f32 %v621, %v629
          %v787 = vsub.f32 %v625, %v629
          %v788 = vsub.f32 %v621, %v634
          %v789 = vsub.f32 %v625, %v634
          %v790 = vsub.f32 %v621, %v639
          %v791 = vsub.f32 %v625, %v639
          %v792 = vsub.f32 %v621, %v644
          %v793 = vsub.f32 %v625, %v644
          %v794 = vsub.f32 %v621, %v649
          %v795 = vsub.f32 %v625, %v649
          %v796 = vsub.f32 %v621, %v654
          %v797 = vsub.f32 %v625, %v654
          %v798 = vsub.f32 %v621, %v659
          %v799 = vsub.f32 %v625, %v659
          %v800 = vsub.f32 %v621, %v664
          %v801 = vsub.f32 %v625, %v664
          %v802 = vsub.f32 %v621, %v669
          %v803 = vsub.f32 %v625, %v669
          %v804 = vsub.f32 %v621, %v674
          %v805 = vsub.f32 %v625, %v674
          %v806 = vsub.f32 %v621, %v679
          %v807 = vsub.f32 %v625, %v679
          %v808 = vsub.f32 %v621, %v684
          %v809 = vsub.f32 %v625, %v684
          %v810 = vsub.f32 %v621, %v689
          %v811 = vsub.f32 %v625, %v689
          %v812 = vsub.f32 %v621, %v694
          %v813 = vsub.f32 %v625, %v694
          %v814 = vsub.f32 %v621, %v699
          %v815 = vsub.f32 %v625, %v699
          %v816 = vsub.f32 %v621, %v704
          %v817 = vsub.f32 %v625, %v704
          %v818 = vsub.f32 %v621, %v709
          %v819 = vsub.f32 %v625, %v709
          %v820 = vsub.f32 %v621, %v714
          %v821 = vsub.f32 %v625, %v714
          %v822 = vsub.f32 %v621, %v719
          %v823 = vsub.f32 %v625, %v719
          %v824 = vsub.f32 %v621, %v724
          %v825 = vsub.f32 %v625, %v724
          %v826 = vsub.f32 %v621, %v729
          %v827 = vsub.f32 %v625, %v729
          %v828 = vsub.f32 %v621, %v734
          %v829 = vsub.f32 %v625, %v734
          %v830 = vsub.f32 %v621, %v739
          %v831 = vsub.f32 %v625, %v739
          %v832 = vsub.f32 %v621, %v744
          %v833 = vsub.f32 %v625, %v744
          %v834 = vsub.f32 %v621, %v749
          %v835 = vsub.f32 %v625, %v749
          %v836 = vsub.f32 %v621, %v754
          %v837 = vsub.f32 %v625, %v754
          %v838 = vsub.f32 %v621, %v759
          %v839 = vsub.f32 %v625, %v759
          %v840 = vsub.f32 %v621, %v764
          %v841 = vsub.f32 %v625, %v764
          %v842 = vsub.f32 %v621, %v769
          %v843 = vsub.f32 %v625, %v769
          %v844 = vsub.f32 %v621, %v774
          %v845 = vsub.f32 %v625, %v774
          %v846 = vsub.f32 %v621, %v779
          %v847 = vsub.f32 %v625, %v779
          %v848 = vsub.f32 %v621, %v784
          %v849 = vsub.f32 %v625, %v784
          %v850 = vpack.c.bf16 %v788, %v786
          %v851 = vpack.c.bf16 %v789, %v787
          %v852 = vpack.c.bf16 %v792, %v790
          %v853 = vpack.c.bf16 %v793, %v791
          %v854 = vpack.c.bf16 %v796, %v794
          %v855 = vpack.c.bf16 %v797, %v795
          %v856 = vpack.c.bf16 %v800, %v798
          %v857 = vpack.c.bf16 %v801, %v799
          %v858 = vpack.c.bf16 %v804, %v802
          %v859 = vpack.c.bf16 %v805, %v803
          %v860 = vpack.c.bf16 %v808, %v806
          %v861 = vpack.c.bf16 %v809, %v807
          %v862 = vpack.c.bf16 %v812, %v810
          %v863 = vpack.c.bf16 %v813, %v811
          %v864 = vpack.c.bf16 %v816, %v814
          %v865 = vpack.c.bf16 %v817, %v815
          %v866 = vpack.c.bf16 %v820, %v818
          %v867 = vpack.c.bf16 %v821, %v819
          %v868 = vpack.c.bf16 %v824, %v822
          %v869 = vpack.c.bf16 %v825, %v823
          %v870 = vpack.c.bf16 %v828, %v826
          %v871 = vpack.c.bf16 %v829, %v827
          %v872 = vpack.c.bf16 %v832, %v830
          %v873 = vpack.c.bf16 %v833, %v831
          %v874 = vpack.c.bf16 %v836, %v834
          %v875 = vpack.c.bf16 %v837, %v835
          %v876 = vpack.c.bf16 %v840, %v838
          %v877 = vpack.c.bf16 %v841, %v839
          %v878 = vpack.c.bf16 %v844, %v842
          %v879 = vpack.c.bf16 %v845, %v843
          %v880 = vpack.c.bf16 %v848, %v846
          %v881 = vpack.c.bf16 %v849, %v847
          %v882 = vlaneseq
          %v883 = vshrl.u32 %v882, 7
          %v884 = vsub.s32 0, %v883
          %v885 = vrot.slane %v574, %v884
          %v886 = vlaneseq
          %v887 = vshrl.u32 %v886, 7
          %v888 = vsub.s32 2, %v887
          %v889 = vrot.slane %v574, %v888
          %v892 = vlaneseq
          %v893 = vshrl.u32 %v892, 7
          %v894 = vsub.s32 0, %v893
          %v895 = vrot.slane %v885, %v894
          %v896 = vlaneseq
          %v897 = vshrl.u32 %v896, 7
          %v898 = vsub.s32 0, %v897
          %v899 = vrot.slane %v889, %v898
          %900 = vset.pattern.permute.xlu0 0
          %901 = vperm.xlu0 %900, %v575
          %v902 = vpop.permute.xlu0 %901
          %904 = vset.pattern.permute.xlu0 0
          %905 = vperm.xlu0 %904, %v576
          %v906 = vpop.permute.xlu0 %905
          %908 = vset.pattern.permute.xlu0 0
          %909 = vperm.xlu0 %908, %v577
          %v910 = vpop.permute.xlu0 %909
          %912 = vset.pattern.permute.xlu0 0
          %913 = vperm.xlu0 %912, %v578
          %v914 = vpop.permute.xlu0 %913
          %916 = vset.pattern.permute.xlu0 0
          %917 = vperm.xlu0 %916, %v579
          %v918 = vpop.permute.xlu0 %917
          %920 = vset.pattern.permute.xlu0 0
          %921 = vperm.xlu0 %920, %v580
          %v922 = vpop.permute.xlu0 %921
          %924 = vset.pattern.permute.xlu0 0
          %925 = vperm.xlu0 %924, %v581
          %v926 = vpop.permute.xlu0 %925
          %928 = vset.pattern.permute.xlu0 0
          %929 = vperm.xlu0 %928, %v582
          %v930 = vpop.permute.xlu0 %929
          %932 = vset.pattern.permute.xlu0 0
          %933 = vperm.xlu0 %932, %v583
          %v934 = vpop.permute.xlu0 %933
          %936 = vset.pattern.permute.xlu0 0
          %937 = vperm.xlu0 %936, %v584
          %v938 = vpop.permute.xlu0 %937
          %940 = vset.pattern.permute.xlu0 0
          %941 = vperm.xlu0 %940, %v585
          %v942 = vpop.permute.xlu0 %941
          %944 = vset.pattern.permute.xlu0 0
          %945 = vperm.xlu0 %944, %v586
          %v946 = vpop.permute.xlu0 %945
          %948 = vset.pattern.permute.xlu0 0
          %949 = vperm.xlu0 %948, %v587
          %v950 = vpop.permute.xlu0 %949
          %952 = vset.pattern.permute.xlu0 0
          %953 = vperm.xlu0 %952, %v588
          %v954 = vpop.permute.xlu0 %953
          %956 = vset.pattern.permute.xlu0 0
          %957 = vperm.xlu0 %956, %v589
          %v958 = vpop.permute.xlu0 %957
          %960 = vset.pattern.permute.xlu0 0
          %961 = vperm.xlu0 %960, %v590
          %v962 = vpop.permute.xlu0 %961
          %964 = vset.pattern.permute.xlu0 0
          %965 = vperm.xlu0 %964, %v591
          %v966 = vpop.permute.xlu0 %965
          %968 = vset.pattern.permute.xlu0 0
          %969 = vperm.xlu0 %968, %v592
          %v970 = vpop.permute.xlu0 %969
          %972 = vset.pattern.permute.xlu0 0
          %973 = vperm.xlu0 %972, %v593
          %v974 = vpop.permute.xlu0 %973
          %976 = vset.pattern.permute.xlu0 0
          %977 = vperm.xlu0 %976, %v594
          %v978 = vpop.permute.xlu0 %977
          %980 = vset.pattern.permute.xlu0 0
          %981 = vperm.xlu0 %980, %v595
          %v982 = vpop.permute.xlu0 %981
          %984 = vset.pattern.permute.xlu0 0
          %985 = vperm.xlu0 %984, %v596
          %v986 = vpop.permute.xlu0 %985
          %988 = vset.pattern.permute.xlu0 0
          %989 = vperm.xlu0 %988, %v597
          %v990 = vpop.permute.xlu0 %989
          %992 = vset.pattern.permute.xlu0 0
          %993 = vperm.xlu0 %992, %v598
          %v994 = vpop.permute.xlu0 %993
          %996 = vset.pattern.permute.xlu0 0
          %997 = vperm.xlu0 %996, %v599
          %v998 = vpop.permute.xlu0 %997
          %1000 = vset.pattern.permute.xlu0 0
          %1001 = vperm.xlu0 %1000, %v600
          %v1002 = vpop.permute.xlu0 %1001
          %1004 = vset.pattern.permute.xlu0 0
          %1005 = vperm.xlu0 %1004, %v601
          %v1006 = vpop.permute.xlu0 %1005
          %1008 = vset.pattern.permute.xlu0 0
          %1009 = vperm.xlu0 %1008, %v602
          %v1010 = vpop.permute.xlu0 %1009
          %1012 = vset.pattern.permute.xlu0 0
          %1013 = vperm.xlu0 %1012, %v603
          %v1014 = vpop.permute.xlu0 %1013
          %1016 = vset.pattern.permute.xlu0 0
          %1017 = vperm.xlu0 %1016, %v604
          %v1018 = vpop.permute.xlu0 %1017
          %1020 = vset.pattern.permute.xlu0 0
          %1021 = vperm.xlu0 %1020, %v605
          %v1022 = vpop.permute.xlu0 %1021
          %1024 = vset.pattern.permute.xlu0 0
          %1025 = vperm.xlu0 %1024, %v606
          %v1026 = vpop.permute.xlu0 %1025
          %v1028 = vsub.f32 %v895, %v902
          %v1029 = vsub.f32 %v899, %v902
          %v1030 = vsub.f32 %v895, %v906
          %v1031 = vsub.f32 %v899, %v906
          %v1032 = vsub.f32 %v895, %v910
          %v1033 = vsub.f32 %v899, %v910
          %v1034 = vsub.f32 %v895, %v914
          %v1035 = vsub.f32 %v899, %v914
          %v1036 = vsub.f32 %v895, %v918
          %v1037 = vsub.f32 %v899, %v918
          %v1038 = vsub.f32 %v895, %v922
          %v1039 = vsub.f32 %v899, %v922
          %v1040 = vsub.f32 %v895, %v926
          %v1041 = vsub.f32 %v899, %v926
          %v1042 = vsub.f32 %v895, %v930
          %v1043 = vsub.f32 %v899, %v930
          %v1044 = vsub.f32 %v895, %v934
          %v1045 = vsub.f32 %v899, %v934
          %v1046 = vsub.f32 %v895, %v938
          %v1047 = vsub.f32 %v899, %v938
          %v1048 = vsub.f32 %v895, %v942
          %v1049 = vsub.f32 %v899, %v942
          %v1050 = vsub.f32 %v895, %v946
          %v1051 = vsub.f32 %v899, %v946
          %v1052 = vsub.f32 %v895, %v950
          %v1053 = vsub.f32 %v899, %v950
          %v1054 = vsub.f32 %v895, %v954
          %v1055 = vsub.f32 %v899, %v954
          %v1056 = vsub.f32 %v895, %v958
          %v1057 = vsub.f32 %v899, %v958
          %v1058 = vsub.f32 %v895, %v962
          %v1059 = vsub.f32 %v899, %v962
          %v1060 = vsub.f32 %v895, %v966
          %v1061 = vsub.f32 %v899, %v966
          %v1062 = vsub.f32 %v895, %v970
          %v1063 = vsub.f32 %v899, %v970
          %v1064 = vsub.f32 %v895, %v974
          %v1065 = vsub.f32 %v899, %v974
          %v1066 = vsub.f32 %v895, %v978
          %v1067 = vsub.f32 %v899, %v978
          %v1068 = vsub.f32 %v895, %v982
          %v1069 = vsub.f32 %v899, %v982
          %v1070 = vsub.f32 %v895, %v986
          %v1071 = vsub.f32 %v899, %v986
          %v1072 = vsub.f32 %v895, %v990
          %v1073 = vsub.f32 %v899, %v990
          %v1074 = vsub.f32 %v895, %v994
          %v1075 = vsub.f32 %v899, %v994
          %v1076 = vsub.f32 %v895, %v998
          %v1077 = vsub.f32 %v899, %v998
          %v1078 = vsub.f32 %v895, %v1002
          %v1079 = vsub.f32 %v899, %v1002
          %v1080 = vsub.f32 %v895, %v1006
          %v1081 = vsub.f32 %v899, %v1006
          %v1082 = vsub.f32 %v895, %v1010
          %v1083 = vsub.f32 %v899, %v1010
          %v1084 = vsub.f32 %v895, %v1014
          %v1085 = vsub.f32 %v899, %v1014
          %v1086 = vsub.f32 %v895, %v1018
          %v1087 = vsub.f32 %v899, %v1018
          %v1088 = vsub.f32 %v895, %v1022
          %v1089 = vsub.f32 %v899, %v1022
          %v1090 = vsub.f32 %v895, %v1026
          %v1091 = vsub.f32 %v899, %v1026
          %v1092 = vpack.c.bf16 %v1030, %v1028
          %v1093 = vpack.c.bf16 %v1031, %v1029
          %v1094 = vpack.c.bf16 %v1034, %v1032
          %v1095 = vpack.c.bf16 %v1035, %v1033
          %v1096 = vpack.c.bf16 %v1038, %v1036
          %v1097 = vpack.c.bf16 %v1039, %v1037
          %v1098 = vpack.c.bf16 %v1042, %v1040
          %v1099 = vpack.c.bf16 %v1043, %v1041
          %v1100 = vpack.c.bf16 %v1046, %v1044
          %v1101 = vpack.c.bf16 %v1047, %v1045
          %v1102 = vpack.c.bf16 %v1050, %v1048
          %v1103 = vpack.c.bf16 %v1051, %v1049
          %v1104 = vpack.c.bf16 %v1054, %v1052
          %v1105 = vpack.c.bf16 %v1055, %v1053
          %v1106 = vpack.c.bf16 %v1058, %v1056
          %v1107 = vpack.c.bf16 %v1059, %v1057
          %v1108 = vpack.c.bf16 %v1062, %v1060
          %v1109 = vpack.c.bf16 %v1063, %v1061
          %v1110 = vpack.c.bf16 %v1066, %v1064
          %v1111 = vpack.c.bf16 %v1067, %v1065
          %v1112 = vpack.c.bf16 %v1070, %v1068
          %v1113 = vpack.c.bf16 %v1071, %v1069
          %v1114 = vpack.c.bf16 %v1074, %v1072
          %v1115 = vpack.c.bf16 %v1075, %v1073
          %v1116 = vpack.c.bf16 %v1078, %v1076
          %v1117 = vpack.c.bf16 %v1079, %v1077
          %v1118 = vpack.c.bf16 %v1082, %v1080
          %v1119 = vpack.c.bf16 %v1083, %v1081
          %v1120 = vpack.c.bf16 %v1086, %v1084
          %v1121 = vpack.c.bf16 %v1087, %v1085
          %v1122 = vpack.c.bf16 %v1090, %v1088
          %v1123 = vpack.c.bf16 %v1091, %v1089
          %v1124 = vand.u32 2147450879, %v850
          %v1125 = vand.u32 2147450879, %v851
          %v1126 = vand.u32 2147450879, %v852
          %v1127 = vand.u32 2147450879, %v853
          %v1128 = vand.u32 2147450879, %v854
          %v1129 = vand.u32 2147450879, %v855
          %v1130 = vand.u32 2147450879, %v856
          %v1131 = vand.u32 2147450879, %v857
          %v1132 = vand.u32 2147450879, %v858
          %v1133 = vand.u32 2147450879, %v859
          %v1134 = vand.u32 2147450879, %v860
          %v1135 = vand.u32 2147450879, %v861
          %v1136 = vand.u32 2147450879, %v862
          %v1137 = vand.u32 2147450879, %v863
          %v1138 = vand.u32 2147450879, %v864
          %v1139 = vand.u32 2147450879, %v865
          %v1140 = vand.u32 2147450879, %v866
          %v1141 = vand.u32 2147450879, %v867
          %v1142 = vand.u32 2147450879, %v868
          %v1143 = vand.u32 2147450879, %v869
          %v1144 = vand.u32 2147450879, %v870
          %v1145 = vand.u32 2147450879, %v871
          %v1146 = vand.u32 2147450879, %v872
          %v1147 = vand.u32 2147450879, %v873
          %v1148 = vand.u32 2147450879, %v874
          %v1149 = vand.u32 2147450879, %v875
          %v1150 = vand.u32 2147450879, %v876
          %v1151 = vand.u32 2147450879, %v877
          %v1152 = vand.u32 2147450879, %v878
          %v1153 = vand.u32 2147450879, %v879
          %v1154 = vand.u32 2147450879, %v880
          %v1155 = vand.u32 2147450879, %v881
          %v1156 = vsub.bf16 1065369472, %v1124
          %v1157 = vsub.bf16 1065369472, %v1125
          %v1158 = vsub.bf16 1065369472, %v1126
          %v1159 = vsub.bf16 1065369472, %v1127
          %v1160 = vsub.bf16 1065369472, %v1128
          %v1161 = vsub.bf16 1065369472, %v1129
          %v1162 = vsub.bf16 1065369472, %v1130
          %v1163 = vsub.bf16 1065369472, %v1131
          %v1164 = vsub.bf16 1065369472, %v1132
          %v1165 = vsub.bf16 1065369472, %v1133
          %v1166 = vsub.bf16 1065369472, %v1134
          %v1167 = vsub.bf16 1065369472, %v1135
          %v1168 = vsub.bf16 1065369472, %v1136
          %v1169 = vsub.bf16 1065369472, %v1137
          %v1170 = vsub.bf16 1065369472, %v1138
          %v1171 = vsub.bf16 1065369472, %v1139
          %v1172 = vsub.bf16 1065369472, %v1140
          %v1173 = vsub.bf16 1065369472, %v1141
          %v1174 = vsub.bf16 1065369472, %v1142
          %v1175 = vsub.bf16 1065369472, %v1143
          %v1176 = vsub.bf16 1065369472, %v1144
          %v1177 = vsub.bf16 1065369472, %v1145
          %v1178 = vsub.bf16 1065369472, %v1146
          %v1179 = vsub.bf16 1065369472, %v1147
          %v1180 = vsub.bf16 1065369472, %v1148
          %v1181 = vsub.bf16 1065369472, %v1149
          %v1182 = vsub.bf16 1065369472, %v1150
          %v1183 = vsub.bf16 1065369472, %v1151
          %v1184 = vsub.bf16 1065369472, %v1152
          %v1185 = vsub.bf16 1065369472, %v1153
          %v1186 = vsub.bf16 1065369472, %v1154
          %v1187 = vsub.bf16 1065369472, %v1155
          %v1188 = vmax.bf16 %v1156, 0
          %v1189 = vmax.bf16 %v1157, 0
          %v1190 = vmax.bf16 %v1158, 0
          %v1191 = vmax.bf16 %v1159, 0
          %v1192 = vmax.bf16 %v1160, 0
          %v1193 = vmax.bf16 %v1161, 0
          %v1194 = vmax.bf16 %v1162, 0
          %v1195 = vmax.bf16 %v1163, 0
          %v1196 = vmax.bf16 %v1164, 0
          %v1197 = vmax.bf16 %v1165, 0
          %v1198 = vmax.bf16 %v1166, 0
          %v1199 = vmax.bf16 %v1167, 0
          %v1200 = vmax.bf16 %v1168, 0
          %v1201 = vmax.bf16 %v1169, 0
          %v1202 = vmax.bf16 %v1170, 0
          %v1203 = vmax.bf16 %v1171, 0
          %v1204 = vmax.bf16 %v1172, 0
          %v1205 = vmax.bf16 %v1173, 0
          %v1206 = vmax.bf16 %v1174, 0
          %v1207 = vmax.bf16 %v1175, 0
          %v1208 = vmax.bf16 %v1176, 0
          %v1209 = vmax.bf16 %v1177, 0
          %v1210 = vmax.bf16 %v1178, 0
          %v1211 = vmax.bf16 %v1179, 0
          %v1212 = vmax.bf16 %v1180, 0
          %v1213 = vmax.bf16 %v1181, 0
          %v1214 = vmax.bf16 %v1182, 0
          %v1215 = vmax.bf16 %v1183, 0
          %v1216 = vmax.bf16 %v1184, 0
          %v1217 = vmax.bf16 %v1185, 0
          %v1218 = vmax.bf16 %v1186, 0
          %v1219 = vmax.bf16 %v1187, 0
          %v1220 = vand.u32 2147450879, %v1092
          %v1221 = vand.u32 2147450879, %v1093
          %v1222 = vand.u32 2147450879, %v1094
          %v1223 = vand.u32 2147450879, %v1095
          %v1224 = vand.u32 2147450879, %v1096
          %v1225 = vand.u32 2147450879, %v1097
          %v1226 = vand.u32 2147450879, %v1098
          %v1227 = vand.u32 2147450879, %v1099
          %v1228 = vand.u32 2147450879, %v1100
          %v1229 = vand.u32 2147450879, %v1101
          %v1230 = vand.u32 2147450879, %v1102
          %v1231 = vand.u32 2147450879, %v1103
          %v1232 = vand.u32 2147450879, %v1104
          %v1233 = vand.u32 2147450879, %v1105
          %v1234 = vand.u32 2147450879, %v1106
          %v1235 = vand.u32 2147450879, %v1107
          %v1236 = vand.u32 2147450879, %v1108
          %v1237 = vand.u32 2147450879, %v1109
          %v1238 = vand.u32 2147450879, %v1110
          %v1239 = vand.u32 2147450879, %v1111
          %v1240 = vand.u32 2147450879, %v1112
          %v1241 = vand.u32 2147450879, %v1113
          %v1242 = vand.u32 2147450879, %v1114
          %v1243 = vand.u32 2147450879, %v1115
          %v1244 = vand.u32 2147450879, %v1116
          %v1245 = vand.u32 2147450879, %v1117
          %v1246 = vand.u32 2147450879, %v1118
          %v1247 = vand.u32 2147450879, %v1119
          %v1248 = vand.u32 2147450879, %v1120
          %v1249 = vand.u32 2147450879, %v1121
          %v1250 = vand.u32 2147450879, %v1122
          %v1251 = vand.u32 2147450879, %v1123
          %v1252 = vsub.bf16 1065369472, %v1220
          %v1253 = vsub.bf16 1065369472, %v1221
          %v1254 = vsub.bf16 1065369472, %v1222
          %v1255 = vsub.bf16 1065369472, %v1223
          %v1256 = vsub.bf16 1065369472, %v1224
          %v1257 = vsub.bf16 1065369472, %v1225
          %v1258 = vsub.bf16 1065369472, %v1226
          %v1259 = vsub.bf16 1065369472, %v1227
          %v1260 = vsub.bf16 1065369472, %v1228
          %v1261 = vsub.bf16 1065369472, %v1229
          %v1262 = vsub.bf16 1065369472, %v1230
          %v1263 = vsub.bf16 1065369472, %v1231
          %v1264 = vsub.bf16 1065369472, %v1232
          %v1265 = vsub.bf16 1065369472, %v1233
          %v1266 = vsub.bf16 1065369472, %v1234
          %v1267 = vsub.bf16 1065369472, %v1235
          %v1268 = vsub.bf16 1065369472, %v1236
          %v1269 = vsub.bf16 1065369472, %v1237
          %v1270 = vsub.bf16 1065369472, %v1238
          %v1271 = vsub.bf16 1065369472, %v1239
          %v1272 = vsub.bf16 1065369472, %v1240
          %v1273 = vsub.bf16 1065369472, %v1241
          %v1274 = vsub.bf16 1065369472, %v1242
          %v1275 = vsub.bf16 1065369472, %v1243
          %v1276 = vsub.bf16 1065369472, %v1244
          %v1277 = vsub.bf16 1065369472, %v1245
          %v1278 = vsub.bf16 1065369472, %v1246
          %v1279 = vsub.bf16 1065369472, %v1247
          %v1280 = vsub.bf16 1065369472, %v1248
          %v1281 = vsub.bf16 1065369472, %v1249
          %v1282 = vsub.bf16 1065369472, %v1250
          %v1283 = vsub.bf16 1065369472, %v1251
          %v1284 = vmax.bf16 %v1252, 0
          %v1285 = vmax.bf16 %v1253, 0
          %v1286 = vmax.bf16 %v1254, 0
          %v1287 = vmax.bf16 %v1255, 0
          %v1288 = vmax.bf16 %v1256, 0
          %v1289 = vmax.bf16 %v1257, 0
          %v1290 = vmax.bf16 %v1258, 0
          %v1291 = vmax.bf16 %v1259, 0
          %v1292 = vmax.bf16 %v1260, 0
          %v1293 = vmax.bf16 %v1261, 0
          %v1294 = vmax.bf16 %v1262, 0
          %v1295 = vmax.bf16 %v1263, 0
          %v1296 = vmax.bf16 %v1264, 0
          %v1297 = vmax.bf16 %v1265, 0
          %v1298 = vmax.bf16 %v1266, 0
          %v1299 = vmax.bf16 %v1267, 0
          %v1300 = vmax.bf16 %v1268, 0
          %v1301 = vmax.bf16 %v1269, 0
          %v1302 = vmax.bf16 %v1270, 0
          %v1303 = vmax.bf16 %v1271, 0
          %v1304 = vmax.bf16 %v1272, 0
          %v1305 = vmax.bf16 %v1273, 0
          %v1306 = vmax.bf16 %v1274, 0
          %v1307 = vmax.bf16 %v1275, 0
          %v1308 = vmax.bf16 %v1276, 0
          %v1309 = vmax.bf16 %v1277, 0
          %v1310 = vmax.bf16 %v1278, 0
          %v1311 = vmax.bf16 %v1279, 0
          %v1312 = vmax.bf16 %v1280, 0
          %v1313 = vmax.bf16 %v1281, 0
          %v1314 = vmax.bf16 %v1282, 0
          %v1315 = vmax.bf16 %v1283, 0
          %v1316 = vmul.bf16 %v1188, %v1284
          %v1317 = vmul.bf16 %v1189, %v1285
          %v1318 = vmul.bf16 %v1190, %v1286
          %v1319 = vmul.bf16 %v1191, %v1287
          %v1320 = vmul.bf16 %v1192, %v1288
          %v1321 = vmul.bf16 %v1193, %v1289
          %v1322 = vmul.bf16 %v1194, %v1290
          %v1323 = vmul.bf16 %v1195, %v1291
          %v1324 = vmul.bf16 %v1196, %v1292
          %v1325 = vmul.bf16 %v1197, %v1293
          %v1326 = vmul.bf16 %v1198, %v1294
          %v1327 = vmul.bf16 %v1199, %v1295
          %v1328 = vmul.bf16 %v1200, %v1296
          %v1329 = vmul.bf16 %v1201, %v1297
          %v1330 = vmul.bf16 %v1202, %v1298
          %v1331 = vmul.bf16 %v1203, %v1299
          %v1332 = vmul.bf16 %v1204, %v1300
          %v1333 = vmul.bf16 %v1205, %v1301
          %v1334 = vmul.bf16 %v1206, %v1302
          %v1335 = vmul.bf16 %v1207, %v1303
          %v1336 = vmul.bf16 %v1208, %v1304
          %v1337 = vmul.bf16 %v1209, %v1305
          %v1338 = vmul.bf16 %v1210, %v1306
          %v1339 = vmul.bf16 %v1211, %v1307
          %v1340 = vmul.bf16 %v1212, %v1308
          %v1341 = vmul.bf16 %v1213, %v1309
          %v1342 = vmul.bf16 %v1214, %v1310
          %v1343 = vmul.bf16 %v1215, %v1311
          %v1344 = vmul.bf16 %v1216, %v1312
          %v1345 = vmul.bf16 %v1217, %v1313
          %v1346 = vmul.bf16 %v1218, %v1314
          %v1347 = vmul.bf16 %v1219, %v1315
          %v1348 = vld [vmem:[%s521] sm:$0xff]
          %v1350 = vcombine.high %v1348, %v1348
          %v1352 = vpack.c.bf16 %v1348, %v1348
          %v1353 = vpack.c.bf16 %v1350, %v1350
          %v1354 = vld [vmem:[#allocation2] sm:$0xff]
          %1355 = vmatprep.subr.bf16.mxu0 %v1331
          %1356 = vmatpush1.bf16.msra.mxu0 %v1330
          %1357 = vmatprep.subr.bf16.mxu0 %v1329
          %1358 = vmatpush1.bf16.msra.mxu0 %v1328
          %1359 = vmatprep.subr.bf16.mxu0 %v1327
          %1360 = vmatpush1.bf16.msra.mxu0 %v1326
          %1361 = vmatprep.subr.bf16.mxu0 %v1325
          %1362 = vmatpush1.bf16.msra.mxu0 %v1324
          %1363 = vmatprep.subr.bf16.mxu0 %v1323
          %1364 = vmatpush1.bf16.msra.mxu0 %v1322
          %1365 = vmatprep.subr.bf16.mxu0 %v1321
          %1366 = vmatpush1.bf16.msra.mxu0 %v1320
          %1367 = vmatprep.subr.bf16.mxu0 %v1319
          %1368 = vmatpush1.bf16.msra.mxu0 %v1318
          %1369 = vmatprep.subr.bf16.mxu0 %v1317
          %1370 = vmatpush1.bf16.msra.mxu0 %v1316
          %1371 = vmatprep.subr.bf16.mxu0 %v1347
          %1372 = vmatpush2.bf16.msra.mxu0 %v1346
          %1373 = vmatprep.subr.bf16.mxu0 %v1345
          %1374 = vmatpush2.bf16.msra.mxu0 %v1344
          %1375 = vmatprep.subr.bf16.mxu0 %v1343
          %1376 = vmatpush2.bf16.msra.mxu0 %v1342
          %1377 = vmatprep.subr.bf16.mxu0 %v1341
          %1378 = vmatpush2.bf16.msra.mxu0 %v1340
          %1379 = vmatprep.subr.bf16.mxu0 %v1339
          %1380 = vmatpush2.bf16.msra.mxu0 %v1338
          %1381 = vmatprep.subr.bf16.mxu0 %v1337
          %1382 = vmatpush2.bf16.msra.mxu0 %v1336
          %1383 = vmatprep.subr.bf16.mxu0 %v1335
          %1384 = vmatpush2.bf16.msra.mxu0 %v1334
          %1385 = vmatprep.subr.bf16.mxu0 %v1333
          %1386 = vmatpush2.bf16.msra.mxu0 %v1332
          %1387 = vmatprep.mubr.bf16.mxu0 %v1353
          %1388 = vmatmul.mubr.bf16.gmra.mxu0 %v1352
          %v1389 = vpop.f32.mrf.mxu0
          %v1390 = vadd.f32 0.0, %v1389
          %v1391 = vpop.f32.mrf.mxu0
          %v1392 = vadd.f32 0.0, %v1391
          %v1393 = vpop.f32.mrf.mxu0
          %v1394 = vpop.f32.mrf.mxu0
          %1395 = vdwg.mxu0
          %v1398 = vcombine.low %v1390, %v1392
          %v1400 = vadd.f32 %v1354, %v1398
          %1401 = vst [vmem:[#allocation2] sm:$0xff] %v1400
        $region48: #{tpu_custom_call.1} parent=39 // pred_fallthru
          _
        // Predicated region
        $region49: #{tpu_custom_call.1} parent=39 // pred_check
          %p1402 = pneg %p555
        $region50: #{tpu_custom_call.1} parent=39 // pred_check_branch
          %1404 = sbr.rel (%p1402) target = $region52
        $region51: #{tpu_custom_call.1} parent=39 // pred_region
          %v1405 = vld [vmem:[%s472] sm:$0xf]
          %v1406 = vadd.f32 %v1405, 1.0
          %v1407 = vmax.f32 %v1406, 0.0
          %v1408 = vmin.f32 %v1407, 1.0
          %v1409 = vsub.f32 16.0, %v1405
          %v1410 = vmax.f32 %v1409, 0.0
          %v1411 = vmin.f32 %v1410, 1.0
          %v1412 = vmul.f32 %v1408, %v1411
          %v1414 = vrot.slane %v1408, 7
          %v1415 = vrot.slane %v1414, 2
          %v1417 = vmul.f32 %v1412, %v1415
          %v1419 = vrot.slane %v1411, 7
          %v1420 = vrot.slane %v1419, 2
          %v1422 = vmul.f32 %v1417, %v1420
          %vm1423 = vcmp.gt.f32.partialorder %v1422, 0.999
          %v1424 = vsel %vm1423, 1.0, 0.0
          %v1425 = vld [vmem:[%s551] sm:$0x3]
          %v1428 = vunpack.c.l.s4 857870592
          %v1429 = vunpack.c.0.s8 %v1428
          %v1430 = vlaneseq
          %v1431 = vshrl.u32 %v1430, 7
          %v1432 = vsub.s32 %v1429, %v1431
          %v1433 = vrot.slane %v1425, %v1432
          %v1435 = vmul.f32 %v1424, %v1433
          %v1436 = vld [vmem:[#allocation2] sm:$0xff]
          %v1437 = vld [vmem:[%s542] sm:$0xff]
          %v1438 = vsub.f32 %v1436, %v1437
          %v1439 = vand.u32 2147483647, %v1438
          %v1441 = vlaneseq
          %v1442 = vshrl.u32 %v1441, 7
          %v1443 = vsub.s32 0, %v1442
          %v1444 = vrot.slane %v1435, %v1443
          %v1445 = vlaneseq
          %v1446 = vshrl.u32 %v1445, 7
          %v1447 = vsub.s32 2, %v1446
          %v1448 = vrot.slane %v1435, %v1447
          %v1451 = vlaneseq
          %v1452 = vshrl.u32 %v1451, 7
          %v1453 = vsub.s32 0, %v1452
          %v1454 = vrot.slane %v1444, %v1453
          %v1455 = vlaneseq
          %v1456 = vshrl.u32 %v1455, 7
          %v1457 = vsub.s32 0, %v1456
          %v1458 = vrot.slane %v1448, %v1457
          %v1460 = vcombine.high %v1439, %v1439
          %v1462 = vmul.f32 %v1454, %v1439
          %v1463 = vmul.f32 %v1458, %v1460
          %vm1464 = vcmask 1043456
          %v1465 = vsel %vm1464, %v1462, 0.0
          %v1466 = vrot.slane %v1465, 4
          %v1467 = vadd.f32 %v1465, %v1466
          %v1468 = vrot.slane %v1467, 2
          %v1469 = vadd.f32 %v1467, %v1468
          %v1470 = vrot.slane %v1469, 1
          %v1471 = vadd.f32 %v1469, %v1470
          %v1472 = vsel %vm1464, %v1463, 0.0
          %v1473 = vrot.slane %v1472, 4
          %v1474 = vadd.f32 %v1472, %v1473
          %v1475 = vrot.slane %v1474, 2
          %v1476 = vadd.f32 %v1474, %v1475
          %v1477 = vrot.slane %v1476, 1
          %v1478 = vadd.f32 %v1476, %v1477
          %v1481 = vcombine.low %v1471, %v1478
          %v1483 = vunpack.c.l.s4 1966171168
          %v1484 = vunpack.c.0.s8 %v1483
          %v1485 = vlaneseq
          %v1486 = vshrl.u32 %v1485, 7
          %v1487 = vsub.s32 %v1484, %v1486
          %v1488 = vrot.slane %v1481, %v1487
          %v1490 = vunpack.c.l.s4 1966171168
          %v1491 = vunpack.c.0.s8 %v1490
          %v1492 = vlaneseq
          %v1493 = vshrl.u32 %v1492, 7
          %v1494 = vsub.s32 %v1491, %v1493
          %v1495 = vrot.slane %v1488, %v1494
          %v1497 = vlaneseq
          %vm1498 = vcmp.ge.s32.totalorder %v1497, 0
          %vm1499 = vcmp.lt.s32.totalorder %v1497, 256
          %vm1500 = vmand %vm1498, %vm1499
          %1501 = vst.msk [vmem:[%s463] sm:$0x3] %vm1500, %v1495
        $region52: #{tpu_custom_call.1} parent=39 // pred_fallthru
          _
        %s1502 = sand.u32 %s242, 1
        %s1503 = scalar_lea.sflag [#allocation7], %s1502
        %s1504 = sand.u32 %s242, 1
        %s1505 = smul.addr %s1504, 2
        %s1506 = scalar_lea.vmem [#allocation6], %s1505
        // Predicated region
        $region53: #{tpu_custom_call.1} parent=39 // pred_check
          %p1507 = pneg %p252
        $region54: #{tpu_custom_call.1} parent=39 // pred_check_branch
          %1509 = sbr.rel (%p1507) target = $region56
        $region55: #{tpu_custom_call.1} parent=39 // pred_region
          %s1511 = ssub.s32 32, 32
          %1512 = vsyncadd %s1503, %s1511
          %s1513 = smul.addr %s37, 2
          %s1514 = smul.addr %s36, 2
          %s1515 = sadd.s32 %s1513, %s1514
          %s1516 = smul.addr %s1515, 16
          %s1517 = scalar_lea.hbm %s7, %s1516
          %s1519 = sshll.u32 %s1506, 4
          %s1520 = int_to_ptr.vmem [resolvable:$true] %s1519
          %1522 = dma.vmem_to_hbm [thread:$0]  %s1520, 32, %s1517, %s1503
        $region56: #{tpu_custom_call.1} parent=39 // pred_fallthru
          _
      $region40: #{tpu_custom_call.1} parent=5 // pred_fallthru
        _
      %p1523 = scmp.le.s32.totalorder 2, %s26
      // Predicated region
      $region57: #{tpu_custom_call.1} parent=5 // pred_check
        %p1524 = pneg %p1523
      $region58: #{tpu_custom_call.1} parent=5 // pred_check_branch
        %1526 = sbr.rel (%p1524) target = $region60
      $region59: #{tpu_custom_call.1} parent=5 // pred_region
        %s1527 = ssub.s32 %s26, 2
        // Predicated region
        $region61: #{tpu_custom_call.1} parent=59 // pred_check
          %p1528 = pneg %p258
        $region62: #{tpu_custom_call.1} parent=59 // pred_check_branch
          %1530 = sbr.rel (%p1528) target = $region64
        $region63: #{tpu_custom_call.1} parent=59 // pred_region
          %s1531 = sand.u32 %s243, 1
          %s1532 = scalar_lea.sflag [#allocation7], %s1531
          %s1533 = sand.u32 %s243, 1
          %s1534 = smul.addr %s1533, 2
          %s1535 = scalar_lea.vmem [#allocation6], %s1534
          %1536 = dma.done %s1532, 32
        $region64: #{tpu_custom_call.1} parent=59 // pred_fallthru
          _
      $region60: #{tpu_custom_call.1} parent=5 // pred_fallthru
        _
    $region6: #{tpu_custom_call.1} parent=1 // loop_footer
      %s30 = sadd.s32 1, %s26
    $region7: #{tpu_custom_call.1} parent=1 // loop_footer_branch
      %25 = sbr.rel target = $region3
    $region8: #{tpu_custom_call.1} parent=1 // loop_exit
      _
    %1537 = vsyncpa [#allocation7], 1
    %s1538 = scalar_lea.sflag [#allocation7], 1
    %1539 = vsyncpa %s1538, 1

</llo_original>
